<compile_context>
chip_gen: v7x
topology: tpu7x:2x2x1
jax: 0.10.0
libtpu: 0.0.40
codegen_flags: <defaults>
</compile_context>

<pallas_src>
import functools

import numpy as np
import jax
import jax.numpy as jnp
from jax.experimental import pallas as pl
from jax.experimental.pallas import tpu as pltpu

# ---------------------------------------------------------------------------
# Fixed SRM kernel bank (30 kernels, each 1x5x5) -- copied from the module.
# ---------------------------------------------------------------------------
SRM_KERNELS = [[[[0.0, 0.0, 0.0, 0.0, 0.0], [0.0, 0.0, 1.0, 0.0, 0.0], [0.0, 0.0, -1.0, 0.0, 0.0], [0.0, 0.0, 0.0, 0.0, 0.0], [0.0, 0.0, 0.0, 0.0, 0.0]]], [[[0.0, 0.0, 0.0, 0.0, 0.0], [0.0, 0.0, 0.0, 1.0, 0.0], [0.0, 0.0, -1.0, 0.0, 0.0], [0.0, 0.0, 0.0, 0.0, 0.0], [0.0, 0.0, 0.0, 0.0, 0.0]]], [[[0.0, 0.0, 0.0, 0.0, 0.0], [0.0, 0.0, 0.0, 0.0, 0.0], [0.0, 0.0, -1.0, 1.0, 0.0], [0.0, 0.0, 0.0, 0.0, 0.0], [0.0, 0.0, 0.0, 0.0, 0.0]]], [[[0.0, 0.0, 0.0, 0.0, 0.0], [0.0, 0.0, 0.0, 0.0, 0.0], [0.0, 0.0, -1.0, 0.0, 0.0], [0.0, 0.0, 0.0, 1.0, 0.0], [0.0, 0.0, 0.0, 0.0, 0.0]]], [[[0.0, 0.0, 0.0, 0.0, 0.0], [0.0, 0.0, 0.0, 0.0, 0.0], [0.0, 0.0, -1.0, 0.0, 0.0], [0.0, 0.0, 1.0, 0.0, 0.0], [0.0, 0.0, 0.0, 0.0, 0.0]]], [[[0.0, 0.0, 0.0, 0.0, 0.0], [0.0, 0.0, 0.0, 0.0, 0.0], [0.0, 0.0, -1.0, 0.0, 0.0], [0.0, 1.0, 0.0, 0.0, 0.0], [0.0, 0.0, 0.0, 0.0, 0.0]]], [[[0.0, 0.0, 0.0, 0.0, 0.0], [0.0, 0.0, 0.0, 0.0, 0.0], [0.0, 1.0, -1.0, 0.0, 0.0], [0.0, 0.0, 0.0, 0.0, 0.0], [0.0, 0.0, 0.0, 0.0, 0.0]]], [[[0.0, 0.0, 0.0, 0.0, 0.0], [0.0, 1.0, 0.0, 0.0, 0.0], [0.0, 0.0, -1.0, 0.0, 0.0], [0.0, 0.0, 0.0, 0.0, 0.0], [0.0, 0.0, 0.0, 0.0, 0.0]]], [[[0.0, 0.0, 0.0, 0.0, 0.0], [0.0, 0.0, 1.0, 0.0, 0.0], [0.0, 0.0, -2.0, 0.0, 0.0], [0.0, 0.0, 1.0, 0.0, 0.0], [0.0, 0.0, 0.0, 0.0, 0.0]]], [[[0.0, 0.0, 0.0, 0.0, 0.0], [0.0, 0.0, 0.0, 1.0, 0.0], [0.0, 0.0, -2.0, 0.0, 0.0], [0.0, 1.0, 0.0, 0.0, 0.0], [0.0, 0.0, 0.0, 0.0, 0.0]]], [[[0.0, 0.0, 0.0, 0.0, 0.0], [0.0, 0.0, 0.0, 0.0, 0.0], [0.0, 1.0, -2.0, 1.0, 0.0], [0.0, 0.0, 0.0, 0.0, 0.0], [0.0, 0.0, 0.0, 0.0, 0.0]]], [[[0.0, 0.0, 0.0, 0.0, 0.0], [0.0, 1.0, 0.0, 0.0, 0.0], [0.0, 0.0, -2.0, 0.0, 0.0], [0.0, 0.0, 0.0, 1.0, 0.0], [0.0, 0.0, 0.0, 0.0, 0.0]]], [[[0.0, 0.0, -1.0, 0.0, 0.0], [0.0, 0.0, 3.0, 0.0, 0.0], [0.0, 0.0, -3.0, 0.0, 0.0], [0.0, 0.0, 1.0, 0.0, 0.0], [0.0, 0.0, 0.0, 0.0, 0.0]]], [[[0.0, 0.0, 0.0, 0.0, 0.0], [0.0, 0.0, 0.0, 3.0, 0.0], [0.0, 0.0, -3.0, 0.0, 0.0], [0.0, 1.0, 0.0, 0.0, 0.0], [0.0, 0.0, 0.0, 0.0, 0.0]]], [[[0.0, 0.0, 0.0, 0.0, 0.0], [0.0, 0.0, 0.0, 0.0, 0.0], [0.0, 1.0, -3.0, 3.0, 0.0], [0.0, 0.0, 0.0, 0.0, 0.0], [0.0, 0.0, 0.0, 0.0, 0.0]]], [[[0.0, 0.0, 0.0, 0.0, 0.0], [0.0, 1.0, 0.0, 0.0, 0.0], [0.0, 0.0, -3.0, 0.0, 0.0], [0.0, 0.0, 0.0, 3.0, 0.0], [0.0, 0.0, 0.0, 0.0, 0.0]]], [[[0.0, 0.0, 0.0, 0.0, 0.0], [0.0, 0.0, 1.0, 0.0, 0.0], [0.0, 0.0, -3.0, 0.0, 0.0], [0.0, 0.0, 3.0, 0.0, 0.0], [0.0, 0.0, 0.0, 0.0, 0.0]]], [[[0.0, 0.0, 0.0, 0.0, 0.0], [0.0, 0.0, 0.0, 1.0, 0.0], [0.0, 0.0, -3.0, 0.0, 0.0], [0.0, 3.0, 0.0, 0.0, 0.0], [0.0, 0.0, 0.0, 0.0, 0.0]]], [[[0.0, 0.0, 0.0, 0.0, 0.0], [0.0, 0.0, 0.0, 0.0, 0.0], [0.0, 3.0, -3.0, 1.0, 0.0], [0.0, 0.0, 0.0, 0.0, 0.0], [0.0, 0.0, 0.0, 0.0, 0.0]]], [[[0.0, 0.0, 0.0, 0.0, 0.0], [0.0, 3.0, 0.0, 0.0, 0.0], [0.0, 0.0, -3.0, 0.0, 0.0], [0.0, 0.0, 0.0, 1.0, 0.0], [0.0, 0.0, 0.0, 0.0, 0.0]]], [[[0.0, 0.0, 0.0, 0.0, 0.0], [0.0, -1.0, 2.0, -1.0, 0.0], [0.0, 2.0, -4.0, 2.0, 0.0], [0.0, -1.0, 2.0, -1.0, 0.0], [0.0, 0.0, 0.0, 0.0, 0.0]]], [[[0.0, 0.0, 0.0, 0.0, 0.0], [0.0, -1.0, 2.0, -1.0, 0.0], [0.0, 2.0, -4.0, 2.0, 0.0], [0.0, 0.0, 0.0, 0.0, 0.0], [0.0, 0.0, 0.0, 0.0, 0.0]]], [[[0.0, 0.0, 0.0, 0.0, 0.0], [0.0, 0.0, 2.0, -1.0, 0.0], [0.0, 0.0, -4.0, 2.0, 0.0], [0.0, 0.0, 2.0, -1.0, 0.0], [0.0, 0.0, 0.0, 0.0, 0.0]]], [[[0.0, 0.0, 0.0, 0.0, 0.0], [0.0, 0.0, 0.0, 0.0, 0.0], [0.0, 2.0, -4.0, 2.0, 0.0], [0.0, -1.0, 2.0, -1.0, 0.0], [0.0, 0.0, 0.0, 0.0, 0.0]]], [[[0.0, 0.0, 0.0, 0.0, 0.0], [0.0, -1.0, 2.0, 0.0, 0.0], [0.0, 2.0, -4.0, 0.0, 0.0], [0.0, -1.0, 2.0, 0.0, 0.0], [0.0, 0.0, 0.0, 0.0, 0.0]]], [[[-1.0, 2.0, -2.0, 2.0, -1.0], [2.0, -6.0, 8.0, -6.0, 2.0], [-2.0, 8.0, -12.0, 8.0, -2.0], [2.0, -6.0, 8.0, -6.0, 2.0], [-1.0, 2.0, -2.0, 2.0, -1.0]]], [[[-1.0, 2.0, -2.0, 2.0, -1.0], [2.0, -6.0, 8.0, -6.0, 2.0], [-2.0, 8.0, -12.0, 8.0, -2.0], [0.0, 0.0, 0.0, 0.0, 0.0], [0.0, 0.0, 0.0, 0.0, 0.0]]], [[[0.0, 0.0, -2.0, 2.0, -1.0], [0.0, 0.0, 8.0, -6.0, 2.0], [0.0, 0.0, -12.0, 8.0, -2.0], [0.0, 0.0, 8.0, -6.0, 2.0], [0.0, 0.0, -2.0, 2.0, -1.0]]], [[[0.0, 0.0, 0.0, 0.0, 0.0], [0.0, 0.0, 0.0, 0.0, 0.0], [-2.0, 8.0, -12.0, 8.0, -2.0], [2.0, -6.0, 8.0, -6.0, 2.0], [-1.0, 2.0, -2.0, 2.0, -1.0]]], [[[-1.0, 2.0, -2.0, 0.0, 0.0], [2.0, -6.0, 8.0, 0.0, 0.0], [-2.0, 8.0, -12.0, 0.0, 0.0], [2.0, -6.0, 8.0, 0.0, 0.0], [-1.0, 2.0, -2.0, 0.0, 0.0]]]]

NUM_K = 30
KSIZE = 5
PAD = 2
# groups (start, stop) over the 30 SRM responses, matching the PyTorch branches
GROUPS = [(0, 8), (8, 12), (12, 20), (20, 25), (25, 30)]
NUM_OUT = NUM_K + 2 * len(GROUPS)  # 30 + 5 max + 5 min = 40

_OFF = 128          # lane offset of the staged window inside flat_ref (128-aligned)
_GUARD = 128        # trailing guard lanes (only 2 are ever read, always masked)
PIX_BUDGET = 16384  # max output pixels per grid step (~11 MiB VMEM footprint)


def _srm_weight_matrix():
    k = np.asarray(SRM_KERNELS, dtype=np.float32)         # [30, 1, 5, 5]
    return jnp.asarray(k.reshape(NUM_K, KSIZE * KSIZE))   # [30, 25]


# ---------------------------------------------------------------------------
# Pallas kernel: staged padded window + im2col + one MXU matmul + group min/max.
# One (TB images) x (TH rows) block per grid step; all stores are lane-dense.
# ---------------------------------------------------------------------------
def _srm_kernel(lo_ref, hi_ref, w_ref, out_ref, flat_ref, patches_ref,
                *, W, TH, TB):
    # lo_ref      : [TB, 1, TH*W]   padded-plane rows [t*TH, (t+1)*TH), flattened
    # hi_ref      : [TB, 1, TH*W]   padded-plane rows [(t+1)*TH, (t+2)*TH)  (halo src)
    # w_ref       : [30, 25]        SRM kernels (cross-correlation order)
    # out_ref     : [TB, 40, TH*W]  30 responses + 5 group maxes + 5 group mins
    # flat_ref    : [1, NP]         staging buffer: (TH+4)-row window at lane _OFF
    # patches_ref : [25, TB*TH*W]   sublane-major im2col
    THW = TH * W

    # Hoisted column-validity masks for horizontal tap offsets dc != 0.
    col = jax.lax.broadcasted_iota(jnp.int32, (1, THW), 1) % W
    col_mask = {dc: (col >= -dc) if dc < 0 else (col < W - dc)
                for dc in (-2, -1, 1, 2)}

    for i in range(TB):
        # Stage the (TH+4)-row padded window for image i (lane-aligned at _OFF).
        # Guard lanes just before/after the window are never written: every
        # read of them happens at a column-masked position, so no zero-fill.
        flat_ref[0:1, _OFF:_OFF + THW] = lo_ref[i]
        flat_ref[0:1, _OFF + THW:_OFF + THW + 4 * W] = hi_ref[i, :, 0:4 * W]

        # 25 taps = static lane-offset slices of the staged window.
        for dy in range(KSIZE):
            for dx in range(KSIZE):
                dc = dx - PAD
                t = dy * KSIZE + dx
                start = _OFF + dy * W + dc
                tap = flat_ref[0:1, start:start + THW]
                if dc != 0:
                    tap = jnp.where(col_mask[dc], tap, 0.0)
                patches_ref[t:t + 1, i * THW:(i + 1) * THW] = tap

    # Single MXU matmul for the whole block: [30,25] @ [25, TB*TH*W].
    y = jnp.dot(w_ref[...], patches_ref[...],
                preferred_element_type=jnp.float32)        # [30, TB*TH*W]

    # Group max/min as sublane (axis-0) reductions, stored as two [5, N] slabs.
    maxs = jnp.concatenate(
        [jnp.max(y[a:b], axis=0, keepdims=True) for a, b in GROUPS], axis=0)
    mins = jnp.concatenate(
        [jnp.min(y[a:b], axis=0, keepdims=True) for a, b in GROUPS], axis=0)

    ng = len(GROUPS)
    for i in range(TB):
        s0, s1 = i * THW, (i + 1) * THW
        out_ref[i, 0:NUM_K, :] = y[:, s0:s1]
        out_ref[i, NUM_K:NUM_K + ng, :] = maxs[:, s0:s1]
        out_ref[i, NUM_K + ng:NUM_OUT, :] = mins[:, s0:s1]


def _choose_tiles(B, H, W):
    """Pick (batch_tile, row_tile) bounding per-step pixels by PIX_BUDGET."""
    th_cands = [th for th in range(4, H + 1)
                if H % th == 0 and (th * W) % 128 == 0]
    if not th_cands:
        # TODO(synk): pad W to a lane-friendly multiple for odd image widths.
        raise ValueError(
            f"unsupported shape H={H}, W={W}: need a row tile TH>=4 with "
            f"H % TH == 0 and (TH*W) % 128 == 0")
    fitting = [th for th in th_cands if th * W <= PIX_BUDGET]
    th = max(fitting) if fitting else min(th_cands)
    tb = 1
    if th == H:  # whole-image tiles: pack several small images per grid step
        divs = [d for d in range(1, B + 1)
                if B % d == 0 and d <= 8 and d * H * W <= PIX_BUDGET]
        tb = max(divs) if divs else 1
        # keep >= 2 grid steps when possible (both v7x TensorCores busy)
        while tb > 1 and (B // tb) * (H // th) < 2:
            tb = max(d for d in range(1, tb) if B % d == 0)
    return tb, th


def feature_layer(x, *, batch_tile=None, row_tile=None):
    """x: [B, C>=3, H, W] (NCHW, like the PyTorch module). Returns [B, 40, H, W] f32."""
    B, C, H, W = x.shape
    if C < 3:
        raise ValueError("SRM FeatureLayer needs at least 3 input channels")
    tb_auto, th_auto = _choose_tiles(B, H, W)
    TB = int(batch_tile) if batch_tile is not None else tb_auto
    TH = int(row_tile) if row_tile is not None else th_auto
    if B % TB != 0 or H % TH != 0 or (TH * W) % 128 != 0 or TH < 4:
        raise ValueError(f"invalid tiles TB={TB}, TH={TH} for input shape {x.shape}")

    THW = TH * W
    HW = H * W
    Hp = H + TH                               # 2 top pad rows + H + (TH-2) bottom pad rows
    NP = _OFF + (TH + 4) * W + _GUARD         # staging-buffer lanes

    # conv(x0,k)+conv(x1,k)+conv(x2,k) == conv(x0+x1+x2,k).  Sum + height-pad in
    # one fused XLA op so the kernel-side row halo is a plain Blocked window.
    xsum = (x[:, 0] + x[:, 1] + x[:, 2]).astype(jnp.float32)          # [B, H, W]
    xp = jnp.pad(xsum, ((0, 0), (PAD, TH - PAD), (0, 0)))             # [B, Hp, W]
    xp = xp.reshape(B, 1, Hp * W)

    w = _srm_weight_matrix()                                          # [30, 25]
    kernel = functools.partial(_srm_kernel, W=W, TH=TH, TB=TB)
    grid = (B // TB, H // TH)

    # Per-step VMEM footprint: double-buffered ins/outs + scratch + live matmul
    # result (+ headroom); keep the scoped limit comfortably above it.
    per_step = 4 * (TB * THW * (2 * 2 + 2 * NUM_OUT + KSIZE * KSIZE + 48) + NP)
    vmem_limit = int(min(96 * 2**20, max(32 * 2**20, 2 * per_step)))

    out = pl.pallas_call(
        kernel,
        out_shape=jax.ShapeDtypeStruct((B, NUM_OUT, HW), jnp.float32),
        grid_spec=pltpu.PrefetchScalarGridSpec(
            num_scalar_prefetch=0,
            grid=grid,
            in_specs=[
                pl.BlockSpec((TB, 1, THW), lambda b, t: (b, 0, t)),      # tile rows
                pl.BlockSpec((TB, 1, THW), lambda b, t: (b, 0, t + 1)),  # halo source
                pl.BlockSpec((NUM_K, KSIZE * KSIZE), lambda b, t: (0, 0)),
            ],
            out_specs=pl.BlockSpec((TB, NUM_OUT, THW), lambda b, t: (b, 0, t)),
            scratch_shapes=[
                pltpu.VMEM((1, NP), jnp.float32),                      # staged window
                pltpu.VMEM((KSIZE * KSIZE, TB * THW), jnp.float32),    # im2col
            ],
        ),
        compiler_params=pltpu.CompilerParams(
            dimension_semantics=("parallel", "parallel"),
            vmem_limit_bytes=vmem_limit,
        ),
        cost_estimate=pl.CostEstimate(
            flops=2 * NUM_K * KSIZE * KSIZE * B * HW,
            transcendentals=0,
            bytes_accessed=4 * B * HW * (NUM_OUT + 3),
        ),
    )(xp, xp, w)

    # Channels-major already matches NCHW -> only a free reshape, no transpose.
    return out.reshape(B, NUM_OUT, H, W)


# ---------------------------------------------------------------------------
# Pure-JAX reference (lax conv) for a correctness check.
# ---------------------------------------------------------------------------
def _reference(x):
    k = jnp.asarray(np.asarray(SRM_KERNELS, dtype=np.float32))    # [30, 1, 5, 5]
    xs = (x[:, 0] + x[:, 1] + x[:, 2])[:, None].astype(jnp.float32)
    y = jax.lax.conv_general_dilated(
        xs, k, window_strides=(1, 1), padding=[(PAD, PAD), (PAD, PAD)],
        dimension_numbers=("NCHW", "OIHW", "NCHW"))               # [B, 30, H, W]
    maxs = jnp.concatenate(
        [jnp.max(y[:, a:b], axis=1, keepdims=True) for a, b in GROUPS], axis=1)
    mins = jnp.concatenate(
        [jnp.min(y[:, a:b], axis=1, keepdims=True) for a, b in GROUPS], axis=1)
    return jnp.concatenate([y, maxs, mins], axis=1)               # [B, 40, H, W]


if __name__ == "__main__":
    key = jax.random.PRNGKey(0)
    k1, k2 = jax.random.split(key)

    # Test 1: module-like small shapes, automatic tiling (whole-image blocks).
    x1 = jax.random.normal(k1, (2, 4, 16, 16), dtype=jnp.float32)
    y1 = jax.block_until_ready(feature_layer(x1))
    assert y1.shape == (2, NUM_OUT, 16, 16), y1.shape
    y1_ref = jax.block_until_ready(_reference(x1))
    np.testing.assert_allclose(np.asarray(y1), np.asarray(y1_ref),
                               rtol=1e-4, atol=1e-3)

    # Test 2: exercise row tiling (2-row halo) and batch tiling in one call.
    x2 = jax.random.normal(k2, (2, 3, 32, 32), dtype=jnp.float32)
    y2 = jax.block_until_ready(feature_layer(x2, batch_tile=2, row_tile=8))
    assert y2.shape == (2, NUM_OUT, 32, 32), y2.shape
    y2_ref = jax.block_until_ready(_reference(x2))
    np.testing.assert_allclose(np.asarray(y2), np.asarray(y2_ref),
                               rtol=1e-4, atol=1e-3)

    print("KERNEL_OK")
</pallas_src>

<mosaic_0001>
module attributes {stable_mosaic.version = 11 : i64} {
  func.func @_srm_kernel(%arg0: i32, %arg1: i32, %arg2: memref<1x1x256xf32, #tpu.memory_space<vmem>>, %arg3: memref<1x1x256xf32, #tpu.memory_space<vmem>>, %arg4: memref<30x25xf32, #tpu.memory_space<vmem>>, %arg5: memref<1x40x256xf32, #tpu.memory_space<vmem>>, %arg6: memref<1x576xf32, #tpu.memory_space<vmem>>, %arg7: memref<25x256xf32, #tpu.memory_space<vmem>>) attributes {dimension_semantics = [#tpu.dimension_semantics<parallel>, #tpu.dimension_semantics<parallel>], iteration_bounds = array<i64: 2, 1>, scalar_prefetch = 0 : i64, scratch_operands = 2 : i64, tpu.core_type = #tpu.core_type<tc>, window_params = [{transform_indices = @transform_0, window_bounds = array<i64: 1, 1, 256>}, {transform_indices = @transform_1, window_bounds = array<i64: 1, 1, 256>}, {pipeline_mode = #tpu.pipeline_mode<synchronous>, transform_indices = @transform_2, window_bounds = array<i64: 30, 25>}, {transform_indices = @transform_3, window_bounds = array<i64: 1, 40, 256>}]} {
    %0 = tpu.iota {dimensions = array<i32: 1>} : vector<1x256xi32>
    %c16_i32 = arith.constant 16 : i32
    %c0_i32 = arith.constant 0 : i32
    %1 = arith.cmpi eq, %c16_i32, %c0_i32 : i32
    %c1_i32 = arith.constant 1 : i32
    %2 = arith.select %1, %c1_i32, %c16_i32 : i32
    %3 = vector.broadcast %2 : i32 to vector<1x256xi32>
    %4 = arith.remsi %0, %3 : vector<1x256xi32>
    %c0_i32_0 = arith.constant 0 : i32
    %5 = vector.broadcast %c0_i32_0 : i32 to vector<1x256xi32>
    %6 = arith.cmpi ne, %4, %5 : vector<1x256xi32>
    %c0_i32_1 = arith.constant 0 : i32
    %7 = vector.broadcast %c0_i32_1 : i32 to vector<1x256xi32>
    %8 = arith.cmpi slt, %4, %7 : vector<1x256xi32>
    %c0_i32_2 = arith.constant 0 : i32
    %9 = arith.cmpi slt, %2, %c0_i32_2 : i32
    %10 = vector.broadcast %9 : i1 to vector<1x256xi1>
    %11 = vector.broadcast %10 : vector<1x256xi1> to vector<1x256xi1>
    %12 = arith.xori %8, %11 : vector<1x256xi1>
    %13 = arith.andi %12, %6 : vector<1x256xi1>
    %14 = vector.broadcast %2 : i32 to vector<1x256xi32>
    %15 = arith.addi %4, %14 : vector<1x256xi32>
    %16 = arith.select %13, %15, %4 : vector<1x256xi1>, vector<1x256xi32>
    %c2_i32 = arith.constant 2 : i32
    %17 = vector.broadcast %c2_i32 : i32 to vector<1x256xi32>
    %18 = arith.cmpi sge, %16, %17 : vector<1x256xi32>
    %c1_i32_3 = arith.constant 1 : i32
    %19 = vector.broadcast %c1_i32_3 : i32 to vector<1x256xi32>
    %20 = arith.cmpi sge, %16, %19 : vector<1x256xi32>
    %c15_i32 = arith.constant 15 : i32
    %21 = vector.broadcast %c15_i32 : i32 to vector<1x256xi32>
    %22 = arith.cmpi slt, %16, %21 : vector<1x256xi32>
    %c14_i32 = arith.constant 14 : i32
    %23 = vector.broadcast %c14_i32 : i32 to vector<1x256xi32>
    %24 = arith.cmpi slt, %16, %23 : vector<1x256xi32>
    %c0 = arith.constant 0 : index
    %c0_4 = arith.constant 0 : index
    %c0_5 = arith.constant 0 : index
    %25 = vector.load %arg2[%c0, %c0_4, %c0_5] : memref<1x1x256xf32, #tpu.memory_space<vmem>>, vector<1x1x256xf32>
    %26 = vector.shape_cast %25 : vector<1x1x256xf32> to vector<1x256xf32>
    %c0_6 = arith.constant 0 : index
    %c128 = arith.constant 128 : index
    %27 = vector.load %arg6[%c0_6, %c128] : memref<1x576xf32, #tpu.memory_space<vmem>>, vector<1x256xf32>
    tpu.vector_store %arg6[%c0_6, %c128], %26 {strides = array<i32>} : memref<1x576xf32, #tpu.memory_space<vmem>>, vector<1x256xf32>,
    %c0_7 = arith.constant 0 : index
    %c0_8 = arith.constant 0 : index
    %c0_9 = arith.constant 0 : index
    %28 = vector.load %arg3[%c0_7, %c0_8, %c0_9] : memref<1x1x256xf32, #tpu.memory_space<vmem>>, vector<1x1x64xf32>
    %29 = vector.shape_cast %28 : vector<1x1x64xf32> to vector<1x64xf32>
    %c0_10 = arith.constant 0 : index
    %c384 = arith.constant 384 : index
    %30 = vector.load %arg6[%c0_10, %c384] : memref<1x576xf32, #tpu.memory_space<vmem>>, vector<1x64xf32>
    tpu.vector_store %arg6[%c0_10, %c384], %29 {strides = array<i32>} : memref<1x576xf32, #tpu.memory_space<vmem>>, vector<1x64xf32>,
    %c0_11 = arith.constant 0 : index
    %c126 = arith.constant 126 : index
    %31 = vector.load %arg6[%c0_11, %c126] : memref<1x576xf32, #tpu.memory_space<vmem>>, vector<1x256xf32>
    %cst = arith.constant 0.000000e+00 : f32
    %32 = vector.broadcast %cst : f32 to vector<1x256xf32>
    %33 = arith.select %18, %31, %32 : vector<1x256xi1>, vector<1x256xf32>
    %c0_12 = arith.constant 0 : index
    %c0_13 = arith.constant 0 : index
    %34 = vector.load %arg7[%c0_12, %c0_13] : memref<25x256xf32, #tpu.memory_space<vmem>>, vector<1x256xf32>
    tpu.vector_store %arg7[%c0_12, %c0_13], %33 {strides = array<i32>} : memref<25x256xf32, #tpu.memory_space<vmem>>, vector<1x256xf32>,
    %c0_14 = arith.constant 0 : index
    %c127 = arith.constant 127 : index
    %35 = vector.load %arg6[%c0_14, %c127] : memref<1x576xf32, #tpu.memory_space<vmem>>, vector<1x256xf32>
    %cst_15 = arith.constant 0.000000e+00 : f32
    %36 = vector.broadcast %cst_15 : f32 to vector<1x256xf32>
    %37 = arith.select %20, %35, %36 : vector<1x256xi1>, vector<1x256xf32>
    %c1 = arith.constant 1 : index
    %c0_16 = arith.constant 0 : index
    %38 = vector.load %arg7[%c1, %c0_16] : memref<25x256xf32, #tpu.memory_space<vmem>>, vector<1x256xf32>
    tpu.vector_store %arg7[%c1, %c0_16], %37 {strides = array<i32>} : memref<25x256xf32, #tpu.memory_space<vmem>>, vector<1x256xf32>,
    %c0_17 = arith.constant 0 : index
    %c128_18 = arith.constant 128 : index
    %39 = vector.load %arg6[%c0_17, %c128_18] : memref<1x576xf32, #tpu.memory_space<vmem>>, vector<1x256xf32>
    %c2 = arith.constant 2 : index
    %c0_19 = arith.constant 0 : index
    %40 = vector.load %arg7[%c2, %c0_19] : memref<25x256xf32, #tpu.memory_space<vmem>>, vector<1x256xf32>
    tpu.vector_store %arg7[%c2, %c0_19], %39 {strides = array<i32>} : memref<25x256xf32, #tpu.memory_space<vmem>>, vector<1x256xf32>,
    %c0_20 = arith.constant 0 : index
    %c129 = arith.constant 129 : index
    %41 = vector.load %arg6[%c0_20, %c129] : memref<1x576xf32, #tpu.memory_space<vmem>>, vector<1x256xf32>
    %cst_21 = arith.constant 0.000000e+00 : f32
    %42 = vector.broadcast %cst_21 : f32 to vector<1x256xf32>
    %43 = arith.select %22, %41, %42 : vector<1x256xi1>, vector<1x256xf32>
    %c3 = arith.constant 3 : index
    %c0_22 = arith.constant 0 : index
    %44 = vector.load %arg7[%c3, %c0_22] : memref<25x256xf32, #tpu.memory_space<vmem>>, vector<1x256xf32>
    tpu.vector_store %arg7[%c3, %c0_22], %43 {strides = array<i32>} : memref<25x256xf32, #tpu.memory_space<vmem>>, vector<1x256xf32>,
    %c0_23 = arith.constant 0 : index
    %c130 = arith.constant 130 : index
    %45 = vector.load %arg6[%c0_23, %c130] : memref<1x576xf32, #tpu.memory_space<vmem>>, vector<1x256xf32>
    %cst_24 = arith.constant 0.000000e+00 : f32
    %46 = vector.broadcast %cst_24 : f32 to vector<1x256xf32>
    %47 = arith.select %24, %45, %46 : vector<1x256xi1>, vector<1x256xf32>
    %c4 = arith.constant 4 : index
    %c0_25 = arith.constant 0 : index
    %48 = vector.load %arg7[%c4, %c0_25] : memref<25x256xf32, #tpu.memory_space<vmem>>, vector<1x256xf32>
    tpu.vector_store %arg7[%c4, %c0_25], %47 {strides = array<i32>} : memref<25x256xf32, #tpu.memory_space<vmem>>, vector<1x256xf32>,
    %c0_26 = arith.constant 0 : index
    %c142 = arith.constant 142 : index
    %49 = vector.load %arg6[%c0_26, %c142] : memref<1x576xf32, #tpu.memory_space<vmem>>, vector<1x256xf32>
    %cst_27 = arith.constant 0.000000e+00 : f32
    %50 = vector.broadcast %cst_27 : f32 to vector<1x256xf32>
    %51 = arith.select %18, %49, %50 : vector<1x256xi1>, vector<1x256xf32>
    %c5 = arith.constant 5 : index
    %c0_28 = arith.constant 0 : index
    %52 = vector.load %arg7[%c5, %c0_28] : memref<25x256xf32, #tpu.memory_space<vmem>>, vector<1x256xf32>
    tpu.vector_store %arg7[%c5, %c0_28], %51 {strides = array<i32>} : memref<25x256xf32, #tpu.memory_space<vmem>>, vector<1x256xf32>,
    %c0_29 = arith.constant 0 : index
    %c143 = arith.constant 143 : index
    %53 = vector.load %arg6[%c0_29, %c143] : memref<1x576xf32, #tpu.memory_space<vmem>>, vector<1x256xf32>
    %cst_30 = arith.constant 0.000000e+00 : f32
    %54 = vector.broadcast %cst_30 : f32 to vector<1x256xf32>
    %55 = arith.select %20, %53, %54 : vector<1x256xi1>, vector<1x256xf32>
    %c6 = arith.constant 6 : index
    %c0_31 = arith.constant 0 : index
    %56 = vector.load %arg7[%c6, %c0_31] : memref<25x256xf32, #tpu.memory_space<vmem>>, vector<1x256xf32>
    tpu.vector_store %arg7[%c6, %c0_31], %55 {strides = array<i32>} : memref<25x256xf32, #tpu.memory_space<vmem>>, vector<1x256xf32>,
    %c0_32 = arith.constant 0 : index
    %c144 = arith.constant 144 : index
    %57 = vector.load %arg6[%c0_32, %c144] : memref<1x576xf32, #tpu.memory_space<vmem>>, vector<1x256xf32>
    %c7 = arith.constant 7 : index
    %c0_33 = arith.constant 0 : index
    %58 = vector.load %arg7[%c7, %c0_33] : memref<25x256xf32, #tpu.memory_space<vmem>>, vector<1x256xf32>
    tpu.vector_store %arg7[%c7, %c0_33], %57 {strides = array<i32>} : memref<25x256xf32, #tpu.memory_space<vmem>>, vector<1x256xf32>,
    %c0_34 = arith.constant 0 : index
    %c145 = arith.constant 145 : index
    %59 = vector.load %arg6[%c0_34, %c145] : memref<1x576xf32, #tpu.memory_space<vmem>>, vector<1x256xf32>
    %cst_35 = arith.constant 0.000000e+00 : f32
    %60 = vector.broadcast %cst_35 : f32 to vector<1x256xf32>
    %61 = arith.select %22, %59, %60 : vector<1x256xi1>, vector<1x256xf32>
    %c8 = arith.constant 8 : index
    %c0_36 = arith.constant 0 : index
    %62 = vector.load %arg7[%c8, %c0_36] : memref<25x256xf32, #tpu.memory_space<vmem>>, vector<1x256xf32>
    tpu.vector_store %arg7[%c8, %c0_36], %61 {strides = array<i32>} : memref<25x256xf32, #tpu.memory_space<vmem>>, vector<1x256xf32>,
    %c0_37 = arith.constant 0 : index
    %c146 = arith.constant 146 : index
    %63 = vector.load %arg6[%c0_37, %c146] : memref<1x576xf32, #tpu.memory_space<vmem>>, vector<1x256xf32>
    %cst_38 = arith.constant 0.000000e+00 : f32
    %64 = vector.broadcast %cst_38 : f32 to vector<1x256xf32>
    %65 = arith.select %24, %63, %64 : vector<1x256xi1>, vector<1x256xf32>
    %c9 = arith.constant 9 : index
    %c0_39 = arith.constant 0 : index
    %66 = vector.load %arg7[%c9, %c0_39] : memref<25x256xf32, #tpu.memory_space<vmem>>, vector<1x256xf32>
    tpu.vector_store %arg7[%c9, %c0_39], %65 {strides = array<i32>} : memref<25x256xf32, #tpu.memory_space<vmem>>, vector<1x256xf32>,
    %c0_40 = arith.constant 0 : index
    %c158 = arith.constant 158 : index
    %67 = vector.load %arg6[%c0_40, %c158] : memref<1x576xf32, #tpu.memory_space<vmem>>, vector<1x256xf32>
    %cst_41 = arith.constant 0.000000e+00 : f32
    %68 = vector.broadcast %cst_41 : f32 to vector<1x256xf32>
    %69 = arith.select %18, %67, %68 : vector<1x256xi1>, vector<1x256xf32>
    %c10 = arith.constant 10 : index
    %c0_42 = arith.constant 0 : index
    %70 = vector.load %arg7[%c10, %c0_42] : memref<25x256xf32, #tpu.memory_space<vmem>>, vector<1x256xf32>
    tpu.vector_store %arg7[%c10, %c0_42], %69 {strides = array<i32>} : memref<25x256xf32, #tpu.memory_space<vmem>>, vector<1x256xf32>,
    %c0_43 = arith.constant 0 : index
    %c159 = arith.constant 159 : index
    %71 = vector.load %arg6[%c0_43, %c159] : memref<1x576xf32, #tpu.memory_space<vmem>>, vector<1x256xf32>
    %cst_44 = arith.constant 0.000000e+00 : f32
    %72 = vector.broadcast %cst_44 : f32 to vector<1x256xf32>
    %73 = arith.select %20, %71, %72 : vector<1x256xi1>, vector<1x256xf32>
    %c11 = arith.constant 11 : index
    %c0_45 = arith.constant 0 : index
    %74 = vector.load %arg7[%c11, %c0_45] : memref<25x256xf32, #tpu.memory_space<vmem>>, vector<1x256xf32>
    tpu.vector_store %arg7[%c11, %c0_45], %73 {strides = array<i32>} : memref<25x256xf32, #tpu.memory_space<vmem>>, vector<1x256xf32>,
    %c0_46 = arith.constant 0 : index
    %c160 = arith.constant 160 : index
    %75 = vector.load %arg6[%c0_46, %c160] : memref<1x576xf32, #tpu.memory_space<vmem>>, vector<1x256xf32>
    %c12 = arith.constant 12 : index
    %c0_47 = arith.constant 0 : index
    %76 = vector.load %arg7[%c12, %c0_47] : memref<25x256xf32, #tpu.memory_space<vmem>>, vector<1x256xf32>
    tpu.vector_store %arg7[%c12, %c0_47], %75 {strides = array<i32>} : memref<25x256xf32, #tpu.memory_space<vmem>>, vector<1x256xf32>,
    %c0_48 = arith.constant 0 : index
    %c161 = arith.constant 161 : index
    %77 = vector.load %arg6[%c0_48, %c161] : memref<1x576xf32, #tpu.memory_space<vmem>>, vector<1x256xf32>
    %cst_49 = arith.constant 0.000000e+00 : f32
    %78 = vector.broadcast %cst_49 : f32 to vector<1x256xf32>
    %79 = arith.select %22, %77, %78 : vector<1x256xi1>, vector<1x256xf32>
    %c13 = arith.constant 13 : index
    %c0_50 = arith.constant 0 : index
    %80 = vector.load %arg7[%c13, %c0_50] : memref<25x256xf32, #tpu.memory_space<vmem>>, vector<1x256xf32>
    tpu.vector_store %arg7[%c13, %c0_50], %79 {strides = array<i32>} : memref<25x256xf32, #tpu.memory_space<vmem>>, vector<1x256xf32>,
    %c0_51 = arith.constant 0 : index
    %c162 = arith.constant 162 : index
    %81 = vector.load %arg6[%c0_51, %c162] : memref<1x576xf32, #tpu.memory_space<vmem>>, vector<1x256xf32>
    %cst_52 = arith.constant 0.000000e+00 : f32
    %82 = vector.broadcast %cst_52 : f32 to vector<1x256xf32>
    %83 = arith.select %24, %81, %82 : vector<1x256xi1>, vector<1x256xf32>
    %c14 = arith.constant 14 : index
    %c0_53 = arith.constant 0 : index
    %84 = vector.load %arg7[%c14, %c0_53] : memref<25x256xf32, #tpu.memory_space<vmem>>, vector<1x256xf32>
    tpu.vector_store %arg7[%c14, %c0_53], %83 {strides = array<i32>} : memref<25x256xf32, #tpu.memory_space<vmem>>, vector<1x256xf32>,
    %c0_54 = arith.constant 0 : index
    %c174 = arith.constant 174 : index
    %85 = vector.load %arg6[%c0_54, %c174] : memref<1x576xf32, #tpu.memory_space<vmem>>, vector<1x256xf32>
    %cst_55 = arith.constant 0.000000e+00 : f32
    %86 = vector.broadcast %cst_55 : f32 to vector<1x256xf32>
    %87 = arith.select %18, %85, %86 : vector<1x256xi1>, vector<1x256xf32>
    %c15 = arith.constant 15 : index
    %c0_56 = arith.constant 0 : index
    %88 = vector.load %arg7[%c15, %c0_56] : memref<25x256xf32, #tpu.memory_space<vmem>>, vector<1x256xf32>
    tpu.vector_store %arg7[%c15, %c0_56], %87 {strides = array<i32>} : memref<25x256xf32, #tpu.memory_space<vmem>>, vector<1x256xf32>,
    %c0_57 = arith.constant 0 : index
    %c175 = arith.constant 175 : index
    %89 = vector.load %arg6[%c0_57, %c175] : memref<1x576xf32, #tpu.memory_space<vmem>>, vector<1x256xf32>
    %cst_58 = arith.constant 0.000000e+00 : f32
    %90 = vector.broadcast %cst_58 : f32 to vector<1x256xf32>
    %91 = arith.select %20, %89, %90 : vector<1x256xi1>, vector<1x256xf32>
    %c16 = arith.constant 16 : index
    %c0_59 = arith.constant 0 : index
    %92 = vector.load %arg7[%c16, %c0_59] : memref<25x256xf32, #tpu.memory_space<vmem>>, vector<1x256xf32>
    tpu.vector_store %arg7[%c16, %c0_59], %91 {strides = array<i32>} : memref<25x256xf32, #tpu.memory_space<vmem>>, vector<1x256xf32>,
    %c0_60 = arith.constant 0 : index
    %c176 = arith.constant 176 : index
    %93 = vector.load %arg6[%c0_60, %c176] : memref<1x576xf32, #tpu.memory_space<vmem>>, vector<1x256xf32>
    %c17 = arith.constant 17 : index
    %c0_61 = arith.constant 0 : index
    %94 = vector.load %arg7[%c17, %c0_61] : memref<25x256xf32, #tpu.memory_space<vmem>>, vector<1x256xf32>
    tpu.vector_store %arg7[%c17, %c0_61], %93 {strides = array<i32>} : memref<25x256xf32, #tpu.memory_space<vmem>>, vector<1x256xf32>,
    %c0_62 = arith.constant 0 : index
    %c177 = arith.constant 177 : index
    %95 = vector.load %arg6[%c0_62, %c177] : memref<1x576xf32, #tpu.memory_space<vmem>>, vector<1x256xf32>
    %cst_63 = arith.constant 0.000000e+00 : f32
    %96 = vector.broadcast %cst_63 : f32 to vector<1x256xf32>
    %97 = arith.select %22, %95, %96 : vector<1x256xi1>, vector<1x256xf32>
    %c18 = arith.constant 18 : index
    %c0_64 = arith.constant 0 : index
    %98 = vector.load %arg7[%c18, %c0_64] : memref<25x256xf32, #tpu.memory_space<vmem>>, vector<1x256xf32>
    tpu.vector_store %arg7[%c18, %c0_64], %97 {strides = array<i32>} : memref<25x256xf32, #tpu.memory_space<vmem>>, vector<1x256xf32>,
    %c0_65 = arith.constant 0 : index
    %c178 = arith.constant 178 : index
    %99 = vector.load %arg6[%c0_65, %c178] : memref<1x576xf32, #tpu.memory_space<vmem>>, vector<1x256xf32>
    %cst_66 = arith.constant 0.000000e+00 : f32
    %100 = vector.broadcast %cst_66 : f32 to vector<1x256xf32>
    %101 = arith.select %24, %99, %100 : vector<1x256xi1>, vector<1x256xf32>
    %c19 = arith.constant 19 : index
    %c0_67 = arith.constant 0 : index
    %102 = vector.load %arg7[%c19, %c0_67] : memref<25x256xf32, #tpu.memory_space<vmem>>, vector<1x256xf32>
    tpu.vector_store %arg7[%c19, %c0_67], %101 {strides = array<i32>} : memref<25x256xf32, #tpu.memory_space<vmem>>, vector<1x256xf32>,
    %c0_68 = arith.constant 0 : index
    %c190 = arith.constant 190 : index
    %103 = vector.load %arg6[%c0_68, %c190] : memref<1x576xf32, #tpu.memory_space<vmem>>, vector<1x256xf32>
    %cst_69 = arith.constant 0.000000e+00 : f32
    %104 = vector.broadcast %cst_69 : f32 to vector<1x256xf32>
    %105 = arith.select %18, %103, %104 : vector<1x256xi1>, vector<1x256xf32>
    %c20 = arith.constant 20 : index
    %c0_70 = arith.constant 0 : index
    %106 = vector.load %arg7[%c20, %c0_70] : memref<25x256xf32, #tpu.memory_space<vmem>>, vector<1x256xf32>
    tpu.vector_store %arg7[%c20, %c0_70], %105 {strides = array<i32>} : memref<25x256xf32, #tpu.memory_space<vmem>>, vector<1x256xf32>,
    %c0_71 = arith.constant 0 : index
    %c191 = arith.constant 191 : index
    %107 = vector.load %arg6[%c0_71, %c191] : memref<1x576xf32, #tpu.memory_space<vmem>>, vector<1x256xf32>
    %cst_72 = arith.constant 0.000000e+00 : f32
    %108 = vector.broadcast %cst_72 : f32 to vector<1x256xf32>
    %109 = arith.select %20, %107, %108 : vector<1x256xi1>, vector<1x256xf32>
    %c21 = arith.constant 21 : index
    %c0_73 = arith.constant 0 : index
    %110 = vector.load %arg7[%c21, %c0_73] : memref<25x256xf32, #tpu.memory_space<vmem>>, vector<1x256xf32>
    tpu.vector_store %arg7[%c21, %c0_73], %109 {strides = array<i32>} : memref<25x256xf32, #tpu.memory_space<vmem>>, vector<1x256xf32>,
    %c0_74 = arith.constant 0 : index
    %c192 = arith.constant 192 : index
    %111 = vector.load %arg6[%c0_74, %c192] : memref<1x576xf32, #tpu.memory_space<vmem>>, vector<1x256xf32>
    %c22 = arith.constant 22 : index
    %c0_75 = arith.constant 0 : index
    %112 = vector.load %arg7[%c22, %c0_75] : memref<25x256xf32, #tpu.memory_space<vmem>>, vector<1x256xf32>
    tpu.vector_store %arg7[%c22, %c0_75], %111 {strides = array<i32>} : memref<25x256xf32, #tpu.memory_space<vmem>>, vector<1x256xf32>,
    %c0_76 = arith.constant 0 : index
    %c193 = arith.constant 193 : index
    %113 = vector.load %arg6[%c0_76, %c193] : memref<1x576xf32, #tpu.memory_space<vmem>>, vector<1x256xf32>
    %cst_77 = arith.constant 0.000000e+00 : f32
    %114 = vector.broadcast %cst_77 : f32 to vector<1x256xf32>
    %115 = arith.select %22, %113, %114 : vector<1x256xi1>, vector<1x256xf32>
    %c23 = arith.constant 23 : index
    %c0_78 = arith.constant 0 : index
    %116 = vector.load %arg7[%c23, %c0_78] : memref<25x256xf32, #tpu.memory_space<vmem>>, vector<1x256xf32>
    tpu.vector_store %arg7[%c23, %c0_78], %115 {strides = array<i32>} : memref<25x256xf32, #tpu.memory_space<vmem>>, vector<1x256xf32>,
    %c0_79 = arith.constant 0 : index
    %c194 = arith.constant 194 : index
    %117 = vector.load %arg6[%c0_79, %c194] : memref<1x576xf32, #tpu.memory_space<vmem>>, vector<1x256xf32>
    %cst_80 = arith.constant 0.000000e+00 : f32
    %118 = vector.broadcast %cst_80 : f32 to vector<1x256xf32>
    %119 = arith.select %24, %117, %118 : vector<1x256xi1>, vector<1x256xf32>
    %c24 = arith.constant 24 : index
    %c0_81 = arith.constant 0 : index
    %120 = vector.load %arg7[%c24, %c0_81] : memref<25x256xf32, #tpu.memory_space<vmem>>, vector<1x256xf32>
    tpu.vector_store %arg7[%c24, %c0_81], %119 {strides = array<i32>} : memref<25x256xf32, #tpu.memory_space<vmem>>, vector<1x256xf32>,
    %c0_82 = arith.constant 0 : index
    %c0_83 = arith.constant 0 : index
    %121 = vector.load %arg4[%c0_82, %c0_83] : memref<30x25xf32, #tpu.memory_space<vmem>>, vector<30x25xf32>
    %c0_84 = arith.constant 0 : index
    %c0_85 = arith.constant 0 : index
    %122 = vector.load %arg7[%c0_84, %c0_85] : memref<25x256xf32, #tpu.memory_space<vmem>>, vector<25x256xf32>
    %cst_86 = arith.constant dense<0.000000e+00> : vector<30x256xf32>
    %123 = tpu.matmul %121, %122, %cst_86 {dimension_numbers = #tpu.dot_dimension_numbers<[1], [0], [0], [1], [0, 0, 1, 1], [], []>} : vector<30x25xf32>, vector<25x256xf32>, vector<30x256xf32> -> vector<30x256xf32>
    %124 = vector.extract_strided_slice %123 {offsets = [0, 0], sizes = [8, 256], strides = [1, 1]} : vector<30x256xf32> to vector<8x256xf32>
    %cst_87 = arith.constant dense<0xFF800000> : vector<256xf32>
    %125 = vector.multi_reduction <maximumf>, %124, %cst_87 [0] : vector<8x256xf32> to vector<256xf32>
    %126 = vector.shape_cast %125 : vector<256xf32> to vector<1x256xf32>
    %127 = vector.extract_strided_slice %123 {offsets = [8, 0], sizes = [4, 256], strides = [1, 1]} : vector<30x256xf32> to vector<4x256xf32>
    %cst_88 = arith.constant dense<0xFF800000> : vector<256xf32>
    %128 = vector.multi_reduction <maximumf>, %127, %cst_88 [0] : vector<4x256xf32> to vector<256xf32>
    %129 = vector.shape_cast %128 : vector<256xf32> to vector<1x256xf32>
    %130 = vector.extract_strided_slice %123 {offsets = [12, 0], sizes = [8, 256], strides = [1, 1]} : vector<30x256xf32> to vector<8x256xf32>
    %cst_89 = arith.constant dense<0xFF800000> : vector<256xf32>
    %131 = vector.multi_reduction <maximumf>, %130, %cst_89 [0] : vector<8x256xf32> to vector<256xf32>
    %132 = vector.shape_cast %131 : vector<256xf32> to vector<1x256xf32>
    %133 = vector.extract_strided_slice %123 {offsets = [20, 0], sizes = [5, 256], strides = [1, 1]} : vector<30x256xf32> to vector<5x256xf32>
    %cst_90 = arith.constant dense<0xFF800000> : vector<256xf32>
    %134 = vector.multi_reduction <maximumf>, %133, %cst_90 [0] : vector<5x256xf32> to vector<256xf32>
    %135 = vector.shape_cast %134 : vector<256xf32> to vector<1x256xf32>
    %136 = vector.extract_strided_slice %123 {offsets = [25, 0], sizes = [5, 256], strides = [1, 1]} : vector<30x256xf32> to vector<5x256xf32>
    %cst_91 = arith.constant dense<0xFF800000> : vector<256xf32>
    %137 = vector.multi_reduction <maximumf>, %136, %cst_91 [0] : vector<5x256xf32> to vector<256xf32>
    %138 = vector.shape_cast %137 : vector<256xf32> to vector<1x256xf32>
    %139 = tpu.concatenate %126, %129, %132, %135, %138 in 0 : vector<1x256xf32>, vector<1x256xf32>, vector<1x256xf32>, vector<1x256xf32>, vector<1x256xf32> -> vector<5x256xf32>
    %140 = vector.extract_strided_slice %123 {offsets = [0, 0], sizes = [8, 256], strides = [1, 1]} : vector<30x256xf32> to vector<8x256xf32>
    %cst_92 = arith.constant dense<0x7F800000> : vector<256xf32>
    %141 = vector.multi_reduction <minimumf>, %140, %cst_92 [0] : vector<8x256xf32> to vector<256xf32>
    %142 = vector.shape_cast %141 : vector<256xf32> to vector<1x256xf32>
    %143 = vector.extract_strided_slice %123 {offsets = [8, 0], sizes = [4, 256], strides = [1, 1]} : vector<30x256xf32> to vector<4x256xf32>
    %cst_93 = arith.constant dense<0x7F800000> : vector<256xf32>
    %144 = vector.multi_reduction <minimumf>, %143, %cst_93 [0] : vector<4x256xf32> to vector<256xf32>
    %145 = vector.shape_cast %144 : vector<256xf32> to vector<1x256xf32>
    %146 = vector.extract_strided_slice %123 {offsets = [12, 0], sizes = [8, 256], strides = [1, 1]} : vector<30x256xf32> to vector<8x256xf32>
    %cst_94 = arith.constant dense<0x7F800000> : vector<256xf32>
    %147 = vector.multi_reduction <minimumf>, %146, %cst_94 [0] : vector<8x256xf32> to vector<256xf32>
    %148 = vector.shape_cast %147 : vector<256xf32> to vector<1x256xf32>
    %149 = vector.extract_strided_slice %123 {offsets = [20, 0], sizes = [5, 256], strides = [1, 1]} : vector<30x256xf32> to vector<5x256xf32>
    %cst_95 = arith.constant dense<0x7F800000> : vector<256xf32>
    %150 = vector.multi_reduction <minimumf>, %149, %cst_95 [0] : vector<5x256xf32> to vector<256xf32>
    %151 = vector.shape_cast %150 : vector<256xf32> to vector<1x256xf32>
    %152 = vector.extract_strided_slice %123 {offsets = [25, 0], sizes = [5, 256], strides = [1, 1]} : vector<30x256xf32> to vector<5x256xf32>
    %cst_96 = arith.constant dense<0x7F800000> : vector<256xf32>
    %153 = vector.multi_reduction <minimumf>, %152, %cst_96 [0] : vector<5x256xf32> to vector<256xf32>
    %154 = vector.shape_cast %153 : vector<256xf32> to vector<1x256xf32>
    %155 = tpu.concatenate %142, %145, %148, %151, %154 in 0 : vector<1x256xf32>, vector<1x256xf32>, vector<1x256xf32>, vector<1x256xf32>, vector<1x256xf32> -> vector<5x256xf32>
    %c0_97 = arith.constant 0 : index
    %c0_98 = arith.constant 0 : index
    %c0_99 = arith.constant 0 : index
    %156 = vector.load %arg5[%c0_97, %c0_98, %c0_99] : memref<1x40x256xf32, #tpu.memory_space<vmem>>, vector<1x30x256xf32>
    %157 = vector.shape_cast %156 : vector<1x30x256xf32> to vector<30x256xf32>
    %158 = vector.shape_cast %123 : vector<30x256xf32> to vector<1x30x256xf32>
    tpu.vector_store %arg5[%c0_97, %c0_98, %c0_99], %158 {strides = array<i32>} : memref<1x40x256xf32, #tpu.memory_space<vmem>>, vector<1x30x256xf32>,
    %c0_100 = arith.constant 0 : index
    %c30 = arith.constant 30 : index
    %c0_101 = arith.constant 0 : index
    %159 = vector.load %arg5[%c0_100, %c30, %c0_101] : memref<1x40x256xf32, #tpu.memory_space<vmem>>, vector<1x5x256xf32>
    %160 = vector.shape_cast %159 : vector<1x5x256xf32> to vector<5x256xf32>
    %161 = vector.shape_cast %139 : vector<5x256xf32> to vector<1x5x256xf32>
    tpu.vector_store %arg5[%c0_100, %c30, %c0_101], %161 {strides = array<i32>} : memref<1x40x256xf32, #tpu.memory_space<vmem>>, vector<1x5x256xf32>,
    %c0_102 = arith.constant 0 : index
    %c35 = arith.constant 35 : index
    %c0_103 = arith.constant 0 : index
    %162 = vector.load %arg5[%c0_102, %c35, %c0_103] : memref<1x40x256xf32, #tpu.memory_space<vmem>>, vector<1x5x256xf32>
    %163 = vector.shape_cast %162 : vector<1x5x256xf32> to vector<5x256xf32>
    %164 = vector.shape_cast %155 : vector<5x256xf32> to vector<1x5x256xf32>
    tpu.vector_store %arg5[%c0_102, %c35, %c0_103], %164 {strides = array<i32>} : memref<1x40x256xf32, #tpu.memory_space<vmem>>, vector<1x5x256xf32>,
    return
  }
  func.func @transform_0(%arg0: i32, %arg1: i32) -> (i32, i32, i32) {
    %c0_i32 = arith.constant 0 : i32
    %c0_i32_0 = arith.constant 0 : i32
    return %arg0, %c0_i32, %arg1 : i32, i32, i32
  }
  func.func @transform_1(%arg0: i32, %arg1: i32) -> (i32, i32, i32) {
    %c1_i32 = arith.constant 1 : i32
    %0 = arith.addi %arg1, %c1_i32 : i32
    %c0_i32 = arith.constant 0 : i32
    %c0_i32_0 = arith.constant 0 : i32
    return %arg0, %c0_i32, %0 : i32, i32, i32
  }
  func.func @transform_2(%arg0: i32, %arg1: i32) -> (i32, i32) {
    %c0_i32 = arith.constant 0 : i32
    %c0_i32_0 = arith.constant 0 : i32
    %c0_i32_1 = arith.constant 0 : i32
    return %c0_i32, %c0_i32_0 : i32, i32
  }
  func.func @transform_3(%arg0: i32, %arg1: i32) -> (i32, i32, i32) {
    %c0_i32 = arith.constant 0 : i32
    %c0_i32_0 = arith.constant 0 : i32
    return %arg0, %c0_i32, %arg1 : i32, i32, i32
  }
}

</mosaic_0001>

<llo_original>
// kernel: tpu_custom_call.1
$region0: #{tpu_custom_call.1}
  #allocation0 [shape = 'u32[]', space=smem, size = 0x4, offset = 0x4, fixed_abs, tag = 'smem constant byte address 0x4 - core index']
  #allocation1 [shape = 'u32[144,128]{1,0:T(1,128)}', space=vmem, size = 0x12000, scoped, tag = 'internal scratch']
  #allocation2 [shape = 'f32[1,576]{1,0:T(1,128)}', space=vmem, size = 0xa00, scoped, tag = 'scratch operand']
  #allocation3 [shape = 'f32[25,256]{1,0:T(8,128)}', space=vmem, size = 0x8000, scoped, tag = 'scratch operand']
  %s0 = inlined_call_operand.hbm [shape: f32[2,1,512], index: 0, kind: input, shape index: {}]
  %s1 = inlined_call_operand.hbm [shape: f32[2,1,512], index: 1, kind: input, shape index: {}]
  %s2 = inlined_call_operand.hbm [shape: f32[30,25], index: 2, kind: input, shape index: {}]
  %s3 = inlined_call_operand.hbm [shape: f32[2,40,256], index: 3, kind: output, shape index: {}]
  %s4 = sld [smem:[#allocation0]]
  $region57: #{tpu_custom_call.1} parent=0
    _
  %s6 = ssub.s32 1, %s4
  %s7 = scalar_select 0, %s6, %s4
  $region1: #{tpu_custom_call.1} parent=0
    #allocation4 [shape = 'u8[2048]{0}', space=vmem, size = 0x800, scoped, tag = 'input window, operand 0']
    #allocation5 [shape = 's32[2]{0}', space=sflag, size = 0x8, scoped, tag = 'scoped memory for tpu_custom_call.1']
    #allocation6 [shape = 's32[2]{0}', space=sflag, size = 0x8, scoped, tag = 'scoped memory for tpu_custom_call.1']
    #allocation7 [shape = 'u8[2048]{0}', space=vmem, size = 0x800, scoped, tag = 'input window, operand 1']
    #allocation8 [shape = 's32[2]{0}', space=sflag, size = 0x8, scoped, tag = 'scoped memory for tpu_custom_call.1']
    #allocation9 [shape = 'u8[16384]{0}', space=vmem, size = 0x4000, scoped, tag = 'input window, operand 2, single buffered']
    #allocation10 [shape = 'u8[81920]{0}', space=vmem, size = 0x14000, scoped, tag = 'output window, operand 0']
    %8 = vsyncpa [#allocation5], 0
    %s9 = scalar_lea.sflag [#allocation5], 1
    %10 = vsyncpa %s9, 0
    %11 = vsyncpa [#allocation8], 0
    %s12 = scalar_lea.sflag [#allocation8], 1
    %13 = vsyncpa %s12, 0
    %14 = vsyncpa [#allocation6], 0
    %s15 = scalar_lea.sflag [#allocation6], 1
    %16 = vsyncpa %s15, 0
    loop: start=0, step=1, limit=4
    $region2: #{tpu_custom_call.1} parent=1 // loop_pre_header
      _
    $region3: #{tpu_custom_call.1} parent=1 // loop_header
      %s18 = sphi 0, %s22
      %p19 = scmp.ge.s32.totalorder %s18, 4
      %s25 = sphi 0, %s37
      %s26 = sphi 0, %s33
      %s27 = sphi 0, %s25
      %s28 = sphi 0, %s26
      %s29 = sphi 0, %s27
      %s30 = sphi 0, %s28
      %s42 = sphi 0, %s44
      %s45 = sphi 0, %s42
      %s46 = sphi 0, %s45
      %s62 = sphi 0, %s46
      %s72 = sphi 0, %s74
      %s75 = sphi 0, %s72
      %s76 = sphi 0, %s75
      %s92 = sphi 0, %s76
      %s96 = sphi 0, %s96
      %s98 = sphi 0, %s96
      %s99 = sphi 0, %s98
      %s113 = sphi 0, %s99
      %s121 = sphi 0, %s123
      %s124 = sphi 0, %s121
      %s125 = sphi 0, %s124
      %s141 = sphi 0, %s125
    $region4: #{tpu_custom_call.1} parent=1 // loop_header_branch
      %21 = sbr.rel (%p19) target = $region8
    $region5: #{tpu_custom_call.1} parent=1 // loop_body
      %s23 = ssub.s32 %s18, 1
      %s24 = ssub.s32 %s18, 2
      %s31 = sadd.s32 1, %s26
      %p32 = scmp.ge.s32.totalorder %s31, 1
      %s33 = scalar_select %p32, 0, %s31
      %s34 = sadd.s32 1, %s25
      %s35 = scalar_select %p32, %s34, %s25
      %p36 = scmp.ge.s32.totalorder %s35, 2
      %s37 = scalar_select %p36, 0, %s35
      %s38 = ssub.s32 %s25, %s37
      %s39 = ssub.s32 %s26, %s33
      %s40 = sor.u32 %s38, %s39
      %p41 = scmp.eq.s32.totalorder %s40, 0
      %s43 = sadd.s32 %s42, 1
      %s44 = scalar_select %p41, %s42, %s43
      %p47 = pneg %p41
      %p48 = scmp.eq.s32.totalorder %s18, 1
      %p49 = por %p47, %p48
      %p50 = scmp.ne.s32.totalorder %s42, %s45
      %p51 = scmp.eq.s32.totalorder %s18, 0
      %p52 = por %p50, %p51
      %p53 = scmp.ne.s32.totalorder %s42, %s45
      %p54 = scmp.eq.s32.totalorder %s23, 1
      %p55 = por %p53, %p54
      %p56 = scmp.ne.s32.totalorder %s45, %s46
      %p57 = scmp.eq.s32.totalorder %s23, 0
      %p58 = por %p56, %p57
      %p59 = scmp.ne.s32.totalorder %s45, %s46
      %p60 = scmp.eq.s32.totalorder %s24, 1
      %p61 = por %p59, %p60
      %p63 = scmp.ne.s32.totalorder %s46, %s62
      %p64 = scmp.eq.s32.totalorder %s24, 0
      %p65 = por %p63, %p64
      %s66 = sadd.s32 %s26, 1
      %s67 = sadd.s32 %s33, 1
      %s68 = ssub.s32 %s25, %s37
      %s69 = ssub.s32 %s66, %s67
      %s70 = sor.u32 %s68, %s69
      %p71 = scmp.eq.s32.totalorder %s70, 0
      %s73 = sadd.s32 %s72, 1
      %s74 = scalar_select %p71, %s72, %s73
      %p77 = pneg %p71
      %p78 = scmp.eq.s32.totalorder %s18, 1
      %p79 = por %p77, %p78
      %p80 = scmp.ne.s32.totalorder %s72, %s75
      %p81 = scmp.eq.s32.totalorder %s18, 0
      %p82 = por %p80, %p81
      %p83 = scmp.ne.s32.totalorder %s72, %s75
      %p84 = scmp.eq.s32.totalorder %s23, 1
      %p85 = por %p83, %p84
      %p86 = scmp.ne.s32.totalorder %s75, %s76
      %p87 = scmp.eq.s32.totalorder %s23, 0
      %p88 = por %p86, %p87
      %p89 = scmp.ne.s32.totalorder %s75, %s76
      %p90 = scmp.eq.s32.totalorder %s24, 1
      %p91 = por %p89, %p90
      %p93 = scmp.ne.s32.totalorder %s76, %s92
      %p94 = scmp.eq.s32.totalorder %s24, 0
      %p95 = por %p93, %p94
      %s97 = sadd.s32 %s96, 1
      %p100 = scmp.eq.s32.totalorder %s18, 1
      %p101 = scmp.ne.s32.totalorder %s96, %s98
      %p102 = scmp.eq.s32.totalorder %s18, 0
      %p103 = por %p101, %p102
      %p104 = scmp.ne.s32.totalorder %s96, %s98
      %p105 = scmp.eq.s32.totalorder %s23, 1
      %p106 = por %p104, %p105
      %p107 = scmp.ne.s32.totalorder %s98, %s99
      %p108 = scmp.eq.s32.totalorder %s23, 0
      %p109 = por %p107, %p108
      %p110 = scmp.ne.s32.totalorder %s98, %s99
      %p111 = scmp.eq.s32.totalorder %s24, 1
      %p112 = por %p110, %p111
      %p114 = scmp.ne.s32.totalorder %s99, %s113
      %p115 = scmp.eq.s32.totalorder %s24, 0
      %p116 = por %p114, %p115
      %s117 = ssub.s32 %s25, %s37
      %s118 = ssub.s32 %s26, %s33
      %s119 = sor.u32 %s117, %s118
      %p120 = scmp.eq.s32.totalorder %s119, 0
      %s122 = sadd.s32 %s121, 1
      %s123 = scalar_select %p120, %s121, %s122
      %p126 = pneg %p120
      %p127 = scmp.eq.s32.totalorder %s18, 1
      %p128 = por %p126, %p127
      %p129 = scmp.ne.s32.totalorder %s121, %s124
      %p130 = scmp.eq.s32.totalorder %s18, 0
      %p131 = por %p129, %p130
      %p132 = scmp.ne.s32.totalorder %s121, %s124
      %p133 = scmp.eq.s32.totalorder %s23, 1
      %p134 = por %p132, %p133
      %p135 = scmp.ne.s32.totalorder %s124, %s125
      %p136 = scmp.eq.s32.totalorder %s23, 0
      %p137 = por %p135, %p136
      %p138 = scmp.ne.s32.totalorder %s124, %s125
      %p139 = scmp.eq.s32.totalorder %s24, 1
      %p140 = por %p138, %p139
      %p142 = scmp.ne.s32.totalorder %s125, %s141
      %p143 = scmp.eq.s32.totalorder %s24, 0
      %p144 = por %p142, %p143
      %p145 = scmp.le.s32.totalorder 1, %s18
      %p146 = scmp.lt.s32.totalorder %s18, 3
      %p147 = pnand %p145, %p146
      %p148 = pneg %p147
      // Predicated region
      $region9: #{tpu_custom_call.1} parent=5 // pred_check
        _
      $region10: #{tpu_custom_call.1} parent=5 // pred_check_branch
        %150 = sbr.rel (%p147) target = $region12
      $region11: #{tpu_custom_call.1} parent=5 // pred_region
        %s151 = ssub.s32 %s18, 1
        // Predicated region
        $region13: #{tpu_custom_call.1} parent=11 // pred_check
          %p152 = pneg %p109
        $region14: #{tpu_custom_call.1} parent=11 // pred_check_branch
          %154 = sbr.rel (%p152) target = $region16
        $region15: #{tpu_custom_call.1} parent=11 // pred_region
          %s156 = ssub.s32 512, 512
          %157 = vsyncadd [#allocation8], %s156
          %s158 = sshll.u32 [#allocation9], 4
          %s159 = int_to_ptr.vmem [resolvable:$true] %s158
          %164 = dma.hbm_to_vmem [thread:$0]  %s2, 512, %s159, [#allocation8], 128, 128, 8
        $region16: #{tpu_custom_call.1} parent=11 // pred_fallthru
          _
      $region12: #{tpu_custom_call.1} parent=5 // pred_fallthru
        _
      %p165 = scmp.lt.s32.totalorder %s18, 2
      // Predicated region
      $region17: #{tpu_custom_call.1} parent=5 // pred_check
        %p166 = pneg %p165
      $region18: #{tpu_custom_call.1} parent=5 // pred_check_branch
        %168 = sbr.rel (%p166) target = $region20
      $region19: #{tpu_custom_call.1} parent=5 // pred_region
        // Predicated region
        $region21: #{tpu_custom_call.1} parent=19 // pred_check
          %p169 = pneg %p52
        $region22: #{tpu_custom_call.1} parent=19 // pred_check_branch
          %171 = sbr.rel (%p169) target = $region24
        $region23: #{tpu_custom_call.1} parent=19 // pred_region
          %s172 = sand.u32 %s42, 1
          %s173 = scalar_lea.sflag [#allocation5], %s172
          %s174 = sand.u32 %s42, 1
          %s175 = smul.addr %s174, 2
          %s176 = scalar_lea.vmem [#allocation4], %s175
          %s177 = smul.u32 2, %s26
          %s179 = ssub.s32 32, 32
          %180 = vsyncadd %s173, %s179
          %s181 = smul.addr %s25, 4
          %s182 = sadd.s32 %s177, %s181
          %s183 = smul.addr %s182, 16
          %s184 = scalar_lea.hbm %s0, %s183
          %s186 = sshll.u32 %s176, 4
          %s187 = int_to_ptr.vmem [resolvable:$true] %s186
          %189 = dma.hbm_to_vmem [thread:$0]  %s184, 32, %s187, %s173
        $region24: #{tpu_custom_call.1} parent=19 // pred_fallthru
          _
        // Predicated region
        $region25: #{tpu_custom_call.1} parent=19 // pred_check
          %p190 = pneg %p82
        $region26: #{tpu_custom_call.1} parent=19 // pred_check_branch
          %192 = sbr.rel (%p190) target = $region28
        $region27: #{tpu_custom_call.1} parent=19 // pred_region
          %s193 = sand.u32 %s18, 1
          %s194 = scalar_lea.sflag [#allocation8], %s193
          %s195 = sand.u32 %s72, 1
          %s196 = smul.addr %s195, 2
          %s197 = scalar_lea.vmem [#allocation7], %s196
          %s198 = sadd.s32 %s26, 1
          %s199 = smul.u32 2, %s198
          %s201 = ssub.s32 32, 32
          %202 = vsyncadd %s194, %s201
          %s203 = smul.addr %s25, 4
          %s204 = sadd.s32 %s199, %s203
          %s205 = smul.addr %s204, 16
          %s206 = scalar_lea.hbm %s1, %s205
          %s208 = sshll.u32 %s197, 4
          %s209 = int_to_ptr.vmem [resolvable:$true] %s208
          %211 = dma.hbm_to_vmem [thread:$0]  %s206, 32, %s209, %s194
        $region28: #{tpu_custom_call.1} parent=19 // pred_fallthru
          _
      $region20: #{tpu_custom_call.1} parent=5 // pred_fallthru
        _
      %p212 = scmp.le.s32.totalorder 1, %s18
      %p213 = scmp.lt.s32.totalorder %s18, 3
      %p214 = pnand %p212, %p213
      %p215 = pneg %p214
      // Predicated region
      $region29: #{tpu_custom_call.1} parent=5 // pred_check
        _
      $region30: #{tpu_custom_call.1} parent=5 // pred_check_branch
        %217 = sbr.rel (%p214) target = $region32
      $region31: #{tpu_custom_call.1} parent=5 // pred_region
        %s218 = ssub.s32 %s18, 1
        %s219 = sand.u32 %s45, 1
        %s220 = scalar_lea.sflag [#allocation5], %s219
        %s221 = sand.u32 %s45, 1
        %s222 = smul.addr %s221, 2
        %s223 = scalar_lea.vmem [#allocation4], %s222
        // Predicated region
        $region33: #{tpu_custom_call.1} parent=31 // pred_check
          %p224 = pneg %p58
        $region34: #{tpu_custom_call.1} parent=31 // pred_check_branch
          %226 = sbr.rel (%p224) target = $region36
        $region35: #{tpu_custom_call.1} parent=31 // pred_region
          %227 = dma.done %s220, 32
        $region36: #{tpu_custom_call.1} parent=31 // pred_fallthru
          _
        %s228 = sand.u32 %s23, 1
        %s229 = scalar_lea.sflag [#allocation8], %s228
        %s230 = sand.u32 %s75, 1
        %s231 = smul.addr %s230, 2
        %s232 = scalar_lea.vmem [#allocation7], %s231
        // Predicated region
        $region37: #{tpu_custom_call.1} parent=31 // pred_check
          %p233 = pneg %p88
        $region38: #{tpu_custom_call.1} parent=31 // pred_check_branch
          %235 = sbr.rel (%p233) target = $region40
        $region39: #{tpu_custom_call.1} parent=31 // pred_region
          %236 = dma.done %s229, 32
        $region40: #{tpu_custom_call.1} parent=31 // pred_fallthru
          _
        // Predicated region
        $region41: #{tpu_custom_call.1} parent=31 // pred_check
          %p237 = pneg %p109
        $region42: #{tpu_custom_call.1} parent=31 // pred_check_branch
          %239 = sbr.rel (%p237) target = $region44
        $region43: #{tpu_custom_call.1} parent=31 // pred_region
          %240 = dma.done [#allocation8], 512
        $region44: #{tpu_custom_call.1} parent=31 // pred_fallthru
          _
        %s241 = sand.u32 %s45, 1
        %s242 = scalar_lea.sflag [#allocation5], %s241
        %s243 = sand.u32 %s45, 1
        %s244 = smul.addr %s243, 2
        %s245 = scalar_lea.vmem [#allocation4], %s244
        %p246 = pneg %p58
        %p247 = pneg %p55
        %s248 = sand.u32 %s23, 1
        %s249 = scalar_lea.sflag [#allocation8], %s248
        %s250 = sand.u32 %s75, 1
        %s251 = smul.addr %s250, 2
        %s252 = scalar_lea.vmem [#allocation7], %s251
        %p253 = pneg %p88
        %p254 = pneg %p85
        %p255 = pneg %p109
        %p256 = pneg %p106
        %p257 = pneg %p137
        %p258 = pneg %p134
        %s259 = sand.u32 %s124, 1
        %s260 = scalar_lea.sflag [#allocation6], %s259
        %s261 = sand.u32 %s124, 1
        %s262 = smul.addr %s261, 80
        %s263 = scalar_lea.vmem [#allocation10], %s262
        %s264 = smul.u32 2, %s28
        %s265 = sadd.s32 %s28, 1
        %s266 = smul.u32 2, %s265
        %s267 = smul.u32 2, %s28
        %v268 = vlaneseq
        %v269 = vand.u32 %v268, 127
        %v270 = vadd.s32 %v269, 128
        %vm271 = vcmp.lt.s32.totalorder %v269, 0
        %v272 = vsub.s32 0, %v269
        %v273 = vsel %vm271, %v272, %v269
        %v274 = vshrl.u32 %v273, 4
        %v275 = vand.u32 %v273, 15
        %v276 = vsub.s32 0, %v275
        %v277 = vsel %vm271, %v276, %v275
        %vm278 = vcmp.lt.s32.totalorder %v270, 0
        %v279 = vsub.s32 0, %v270
        %v280 = vsel %vm278, %v279, %v270
        %v281 = vshrl.u32 %v280, 4
        %v282 = vand.u32 %v280, 15
        %v283 = vsub.s32 0, %v282
        %v284 = vsel %vm278, %v283, %v282
        %vm285 = vcmp.ne.s32.totalorder %v277, 0
        %vm286 = vcmp.ne.s32.totalorder %v284, 0
        %vm287 = vcmp.lt.s32.totalorder %v277, 0
        %vm288 = vcmp.lt.s32.totalorder %v284, 0
        %vm289 = vmand %vm287, %vm285
        %vm290 = vmand %vm288, %vm286
        %v291 = vadd.s32 %v277, 16
        %v292 = vadd.s32 %v284, 16
        %v293 = vsel %vm289, %v291, %v277
        %v294 = vsel %vm290, %v292, %v284
        %vm295 = vcmp.ge.s32.totalorder %v293, 2
        %vm296 = vcmp.ge.s32.totalorder %v294, 2
        %vm297 = vcmp.ge.s32.totalorder %v293, 1
        %vm298 = vcmp.ge.s32.totalorder %v294, 1
        %vm299 = vcmp.lt.s32.totalorder %v293, 15
        %vm300 = vcmp.lt.s32.totalorder %v294, 15
        %vm301 = vcmp.lt.s32.totalorder %v293, 14
        %vm302 = vcmp.lt.s32.totalorder %v294, 14
        %v303 = vld [vmem:[%s223] sm:$0x3]
        %v304 = vlaneseq
        %vm305 = vcmp.ge.s32.totalorder %v304, 0
        %vm306 = vcmp.lt.s32.totalorder %v304, 256
        %vm307 = vmand %vm305, %vm306
        %308 = vst.msk [vmem:[#allocation2 + $0x1] sm:$0x3] %vm307, %v303
        %v309 = vld [vmem:[%s232] sm:$0x1]
        %vm310 = vcmp.lt.s32.totalorder %v304, 64
        %vm311 = vmand %vm305, %vm310
        %312 = vst.msk [vmem:[#allocation2 + $0x3] sm:$0x1] %vm311, %v309
        %v313 = vld [vmem:[#allocation2] sm:$0x7]
        %v315 = vlaneseq
        %v316 = vshrl.u32 %v315, 7
        %v317 = vsub.s32 0, %v316
        %v318 = vrot.slane %v313, %v317
        %v319 = vlaneseq
        %v320 = vshrl.u32 %v319, 7
        %v321 = vsub.s32 1, %v320
        %v322 = vrot.slane %v313, %v321
        %v323 = vlaneseq
        %v324 = vshrl.u32 %v323, 7
        %v325 = vsub.s32 2, %v324
        %v326 = vrot.slane %v313, %v325
        %327 = vrot.lane.b32.xlu0 %v318, 2
        %v328 = vpop.permute.xlu0 %327
        %329 = vrot.lane.b32.xlu0 %v322, 2
        %v330 = vpop.permute.xlu0 %329
        %331 = vrot.lane.b32.xlu0 %v326, 2
        %v332 = vpop.permute.xlu0 %331
        %vm333 = vcmask 15360
        %v334 = vsel %vm333, %v328, %v330
        %v335 = vsel %vm333, %v330, %v332
        %v338 = vsel %vm295, %v334, 0.0
        %v339 = vsel %vm296, %v335, 0.0
        %v342 = vcombine.low %v338, %v339
        %v344 = vunpack.c.l.s4 1966171168
        %v345 = vunpack.c.0.s8 %v344
        %v346 = vlaneseq
        %v347 = vshrl.u32 %v346, 7
        %v348 = vsub.s32 %v345, %v347
        %v349 = vrot.slane %v342, %v348
        %v351 = vunpack.c.l.s4 1966171168
        %v352 = vunpack.c.0.s8 %v351
        %v353 = vlaneseq
        %v354 = vshrl.u32 %v353, 7
        %v355 = vsub.s32 %v352, %v354
        %v356 = vrot.slane %v349, %v355
        %358 = vst.msk [vmem:[#allocation3] ss:$8 sm:$0x3] %vm307, %v356
        %359 = vst.msk [vmem:[#allocation3] ss:$8 sm:$0x0] %vm307, %v356
        %v360 = vld [vmem:[#allocation2] sm:$0x7]
        %v362 = vlaneseq
        %v363 = vshrl.u32 %v362, 7
        %v364 = vsub.s32 0, %v363
        %v365 = vrot.slane %v360, %v364
        %v366 = vlaneseq
        %v367 = vshrl.u32 %v366, 7
        %v368 = vsub.s32 1, %v367
        %v369 = vrot.slane %v360, %v368
        %v370 = vlaneseq
        %v371 = vshrl.u32 %v370, 7
        %v372 = vsub.s32 2, %v371
        %v373 = vrot.slane %v360, %v372
        %374 = vrot.lane.b32.xlu0 %v365, 1
        %v375 = vpop.permute.xlu0 %374
        %376 = vrot.lane.b32.xlu0 %v369, 1
        %v377 = vpop.permute.xlu0 %376
        %378 = vrot.lane.b32.xlu0 %v373, 1
        %v379 = vpop.permute.xlu0 %378
        %vm380 = vcmask 7168
        %v381 = vsel %vm380, %v375, %v377
        %v382 = vsel %vm380, %v377, %v379
        %v385 = vsel %vm297, %v381, 0.0
        %v386 = vsel %vm298, %v382, 0.0
        %v389 = vcombine.low %v385, %v386
        %v391 = vunpack.c.l.s4 1966171168
        %v392 = vunpack.c.0.s8 %v391
        %v393 = vlaneseq
        %v394 = vshrl.u32 %v393, 7
        %v395 = vsub.s32 %v392, %v394
        %v396 = vrot.slane %v389, %v395
        %v398 = vunpack.c.l.s4 1966171168
        %v399 = vunpack.c.0.s8 %v398
        %v400 = vlaneseq
        %v401 = vshrl.u32 %v400, 7
        %v402 = vsub.s32 %v399, %v401
        %v403 = vrot.slane %v396, %v402
        %s405 = scalar_lea.vmem [#allocation3], 1
        %406 = vst.msk [vmem:[%s405] ss:$8 sm:$0x3] %vm307, %v403
        %407 = vst.msk [vmem:[%s405] ss:$8 sm:$0x0] %vm307, %v403
        %v408 = vld [vmem:[#allocation2 + $0x1] sm:$0x3]
        %s409 = scalar_lea.vmem [#allocation3], 2
        %410 = vst.msk [vmem:[%s409] ss:$8 sm:$0x3] %vm307, %v408
        %411 = vst.msk [vmem:[%s409] ss:$8 sm:$0x0] %vm307, %v408
        %v412 = vld [vmem:[#allocation2 + $0x1] sm:$0x7]
        %v414 = vlaneseq
        %v415 = vshrl.u32 %v414, 7
        %v416 = vsub.s32 0, %v415
        %v417 = vrot.slane %v412, %v416
        %v418 = vlaneseq
        %v419 = vshrl.u32 %v418, 7
        %v420 = vsub.s32 1, %v419
        %v421 = vrot.slane %v412, %v420
        %v422 = vlaneseq
        %v423 = vshrl.u32 %v422, 7
        %v424 = vsub.s32 2, %v423
        %v425 = vrot.slane %v412, %v424
        %426 = vrot.lane.b32.xlu0 %v417, 127
        %v427 = vpop.permute.xlu0 %426
        %428 = vrot.lane.b32.xlu0 %v421, 127
        %v429 = vpop.permute.xlu0 %428
        %430 = vrot.lane.b32.xlu0 %v425, 127
        %v431 = vpop.permute.xlu0 %430
        %vm432 = vcmask 1039360
        %v433 = vsel %vm432, %v427, %v429
        %v434 = vsel %vm432, %v429, %v431
        %v437 = vsel %vm299, %v433, 0.0
        %v438 = vsel %vm300, %v434, 0.0
        %v441 = vcombine.low %v437, %v438
        %v443 = vunpack.c.l.s4 1966171168
        %v444 = vunpack.c.0.s8 %v443
        %v445 = vlaneseq
        %v446 = vshrl.u32 %v445, 7
        %v447 = vsub.s32 %v444, %v446
        %v448 = vrot.slane %v441, %v447
        %v450 = vunpack.c.l.s4 1966171168
        %v451 = vunpack.c.0.s8 %v450
        %v452 = vlaneseq
        %v453 = vshrl.u32 %v452, 7
        %v454 = vsub.s32 %v451, %v453
        %v455 = vrot.slane %v448, %v454
        %s457 = scalar_lea.vmem [#allocation3], 3
        %458 = vst.msk [vmem:[%s457] ss:$8 sm:$0x3] %vm307, %v455
        %459 = vst.msk [vmem:[%s457] ss:$8 sm:$0x0] %vm307, %v455
        %v460 = vld [vmem:[#allocation2 + $0x1] sm:$0x7]
        %v462 = vlaneseq
        %v463 = vshrl.u32 %v462, 7
        %v464 = vsub.s32 0, %v463
        %v465 = vrot.slane %v460, %v464
        %v466 = vlaneseq
        %v467 = vshrl.u32 %v466, 7
        %v468 = vsub.s32 1, %v467
        %v469 = vrot.slane %v460, %v468
        %v470 = vlaneseq
        %v471 = vshrl.u32 %v470, 7
        %v472 = vsub.s32 2, %v471
        %v473 = vrot.slane %v460, %v472
        %474 = vrot.lane.b32.xlu0 %v465, 126
        %v475 = vpop.permute.xlu0 %474
        %476 = vrot.lane.b32.xlu0 %v469, 126
        %v477 = vpop.permute.xlu0 %476
        %478 = vrot.lane.b32.xlu0 %v473, 126
        %v479 = vpop.permute.xlu0 %478
        %vm480 = vcmask 1031168
        %v481 = vsel %vm480, %v475, %v477
        %v482 = vsel %vm480, %v477, %v479
        %v485 = vsel %vm301, %v481, 0.0
        %v486 = vsel %vm302, %v482, 0.0
        %v489 = vcombine.low %v485, %v486
        %v491 = vunpack.c.l.s4 1966171168
        %v492 = vunpack.c.0.s8 %v491
        %v493 = vlaneseq
        %v494 = vshrl.u32 %v493, 7
        %v495 = vsub.s32 %v492, %v494
        %v496 = vrot.slane %v489, %v495
        %v498 = vunpack.c.l.s4 1966171168
        %v499 = vunpack.c.0.s8 %v498
        %v500 = vlaneseq
        %v501 = vshrl.u32 %v500, 7
        %v502 = vsub.s32 %v499, %v501
        %v503 = vrot.slane %v496, %v502
        %s505 = scalar_lea.vmem [#allocation3], 4
        %506 = vst.msk [vmem:[%s505] ss:$8 sm:$0x3] %vm307, %v503
        %507 = vst.msk [vmem:[%s505] ss:$8 sm:$0x0] %vm307, %v503
        %v508 = vld [vmem:[#allocation2 + $0x1] sm:$0x7]
        %v510 = vlaneseq
        %v511 = vshrl.u32 %v510, 7
        %v512 = vsub.s32 0, %v511
        %v513 = vrot.slane %v508, %v512
        %v514 = vlaneseq
        %v515 = vshrl.u32 %v514, 7
        %v516 = vsub.s32 1, %v515
        %v517 = vrot.slane %v508, %v516
        %v518 = vlaneseq
        %v519 = vshrl.u32 %v518, 7
        %v520 = vsub.s32 2, %v519
        %v521 = vrot.slane %v508, %v520
        %522 = vrot.lane.b32.xlu0 %v513, 114
        %v523 = vpop.permute.xlu0 %522
        %524 = vrot.lane.b32.xlu0 %v517, 114
        %v525 = vpop.permute.xlu0 %524
        %526 = vrot.lane.b32.xlu0 %v521, 114
        %v527 = vpop.permute.xlu0 %526
        %vm528 = vcmask 932864
        %v529 = vsel %vm528, %v523, %v525
        %v530 = vsel %vm528, %v525, %v527
        %v533 = vsel %vm295, %v529, 0.0
        %v534 = vsel %vm296, %v530, 0.0
        %v537 = vcombine.low %v533, %v534
        %v539 = vunpack.c.l.s4 1966171168
        %v540 = vunpack.c.0.s8 %v539
        %v541 = vlaneseq
        %v542 = vshrl.u32 %v541, 7
        %v543 = vsub.s32 %v540, %v542
        %v544 = vrot.slane %v537, %v543
        %v546 = vunpack.c.l.s4 1966171168
        %v547 = vunpack.c.0.s8 %v546
        %v548 = vlaneseq
        %v549 = vshrl.u32 %v548, 7
        %v550 = vsub.s32 %v547, %v549
        %v551 = vrot.slane %v544, %v550
        %s553 = scalar_lea.vmem [#allocation3], 5
        %554 = vst.msk [vmem:[%s553] ss:$8 sm:$0x3] %vm307, %v551
        %555 = vst.msk [vmem:[%s553] ss:$8 sm:$0x0] %vm307, %v551
        %v556 = vld [vmem:[#allocation2 + $0x1] sm:$0x7]
        %v558 = vlaneseq
        %v559 = vshrl.u32 %v558, 7
        %v560 = vsub.s32 0, %v559
        %v561 = vrot.slane %v556, %v560
        %v562 = vlaneseq
        %v563 = vshrl.u32 %v562, 7
        %v564 = vsub.s32 1, %v563
        %v565 = vrot.slane %v556, %v564
        %v566 = vlaneseq
        %v567 = vshrl.u32 %v566, 7
        %v568 = vsub.s32 2, %v567
        %v569 = vrot.slane %v556, %v568
        %570 = vrot.lane.b32.xlu0 %v561, 113
        %v571 = vpop.permute.xlu0 %570
        %572 = vrot.lane.b32.xlu0 %v565, 113
        %v573 = vpop.permute.xlu0 %572
        %574 = vrot.lane.b32.xlu0 %v569, 113
        %v575 = vpop.permute.xlu0 %574
        %vm576 = vcmask 924672
        %v577 = vsel %vm576, %v571, %v573
        %v578 = vsel %vm576, %v573, %v575
        %v581 = vsel %vm297, %v577, 0.0
        %v582 = vsel %vm298, %v578, 0.0
        %v585 = vcombine.low %v581, %v582
        %v587 = vunpack.c.l.s4 1966171168
        %v588 = vunpack.c.0.s8 %v587
        %v589 = vlaneseq
        %v590 = vshrl.u32 %v589, 7
        %v591 = vsub.s32 %v588, %v590
        %v592 = vrot.slane %v585, %v591
        %v594 = vunpack.c.l.s4 1966171168
        %v595 = vunpack.c.0.s8 %v594
        %v596 = vlaneseq
        %v597 = vshrl.u32 %v596, 7
        %v598 = vsub.s32 %v595, %v597
        %v599 = vrot.slane %v592, %v598
        %s601 = scalar_lea.vmem [#allocation3], 6
        %602 = vst.msk [vmem:[%s601] ss:$8 sm:$0x3] %vm307, %v599
        %603 = vst.msk [vmem:[%s601] ss:$8 sm:$0x0] %vm307, %v599
        %v604 = vld [vmem:[#allocation2 + $0x1] sm:$0x7]
        %606 = vrot.lane.b32.xlu0 %v604, 112
        %v607 = vpop.permute.xlu0 %606
        %v608 = vrot.slane %v607, 1
        %vm609 = vcmask 916480
        %v610 = vsel %vm609, %v607, %v608
        %s612 = scalar_lea.vmem [#allocation3], 7
        %613 = vst.msk [vmem:[%s612] ss:$8 sm:$0x3] %vm307, %v610
        %614 = vst.msk [vmem:[%s612] ss:$8 sm:$0x0] %vm307, %v610
        %v615 = vld [vmem:[#allocation2 + $0x1] sm:$0x7]
        %v617 = vlaneseq
        %v618 = vshrl.u32 %v617, 7
        %v619 = vsub.s32 0, %v618
        %v620 = vrot.slane %v615, %v619
        %v621 = vlaneseq
        %v622 = vshrl.u32 %v621, 7
        %v623 = vsub.s32 1, %v622
        %v624 = vrot.slane %v615, %v623
        %v625 = vlaneseq
        %v626 = vshrl.u32 %v625, 7
        %v627 = vsub.s32 2, %v626
        %v628 = vrot.slane %v615, %v627
        %629 = vrot.lane.b32.xlu0 %v620, 111
        %v630 = vpop.permute.xlu0 %629
        %631 = vrot.lane.b32.xlu0 %v624, 111
        %v632 = vpop.permute.xlu0 %631
        %633 = vrot.lane.b32.xlu0 %v628, 111
        %v634 = vpop.permute.xlu0 %633
        %vm635 = vcmask 908288
        %v636 = vsel %vm635, %v630, %v632
        %v637 = vsel %vm635, %v632, %v634
        %v640 = vsel %vm299, %v636, 0.0
        %v641 = vsel %vm300, %v637, 0.0
        %v644 = vcombine.low %v640, %v641
        %v646 = vunpack.c.l.s4 1966171168
        %v647 = vunpack.c.0.s8 %v646
        %v648 = vlaneseq
        %v649 = vshrl.u32 %v648, 7
        %v650 = vsub.s32 %v647, %v649
        %v651 = vrot.slane %v644, %v650
        %v653 = vunpack.c.l.s4 1966171168
        %v654 = vunpack.c.0.s8 %v653
        %v655 = vlaneseq
        %v656 = vshrl.u32 %v655, 7
        %v657 = vsub.s32 %v654, %v656
        %v658 = vrot.slane %v651, %v657
        %s660 = scalar_lea.vmem [#allocation3], 16
        %661 = vst.msk [vmem:[%s660] ss:$8 sm:$0x3] %vm307, %v658
        %662 = vst.msk [vmem:[%s660] ss:$8 sm:$0x0] %vm307, %v658
        %v663 = vld [vmem:[#allocation2 + $0x1] sm:$0x7]
        %v665 = vlaneseq
        %v666 = vshrl.u32 %v665, 7
        %v667 = vsub.s32 0, %v666
        %v668 = vrot.slane %v663, %v667
        %v669 = vlaneseq
        %v670 = vshrl.u32 %v669, 7
        %v671 = vsub.s32 1, %v670
        %v672 = vrot.slane %v663, %v671
        %v673 = vlaneseq
        %v674 = vshrl.u32 %v673, 7
        %v675 = vsub.s32 2, %v674
        %v676 = vrot.slane %v663, %v675
        %677 = vrot.lane.b32.xlu0 %v668, 110
        %v678 = vpop.permute.xlu0 %677
        %679 = vrot.lane.b32.xlu0 %v672, 110
        %v680 = vpop.permute.xlu0 %679
        %681 = vrot.lane.b32.xlu0 %v676, 110
        %v682 = vpop.permute.xlu0 %681
        %vm683 = vcmask 900096
        %v684 = vsel %vm683, %v678, %v680
        %v685 = vsel %vm683, %v680, %v682
        %v688 = vsel %vm301, %v684, 0.0
        %v689 = vsel %vm302, %v685, 0.0
        %v692 = vcombine.low %v688, %v689
        %v694 = vunpack.c.l.s4 1966171168
        %v695 = vunpack.c.0.s8 %v694
        %v696 = vlaneseq
        %v697 = vshrl.u32 %v696, 7
        %v698 = vsub.s32 %v695, %v697
        %v699 = vrot.slane %v692, %v698
        %v701 = vunpack.c.l.s4 1966171168
        %v702 = vunpack.c.0.s8 %v701
        %v703 = vlaneseq
        %v704 = vshrl.u32 %v703, 7
        %v705 = vsub.s32 %v702, %v704
        %v706 = vrot.slane %v699, %v705
        %s708 = scalar_lea.vmem [#allocation3], 17
        %709 = vst.msk [vmem:[%s708] ss:$8 sm:$0x3] %vm307, %v706
        %710 = vst.msk [vmem:[%s708] ss:$8 sm:$0x0] %vm307, %v706
        %v711 = vld [vmem:[#allocation2 + $0x1] sm:$0x7]
        %v713 = vlaneseq
        %v714 = vshrl.u32 %v713, 7
        %v715 = vsub.s32 0, %v714
        %v716 = vrot.slane %v711, %v715
        %v717 = vlaneseq
        %v718 = vshrl.u32 %v717, 7
        %v719 = vsub.s32 1, %v718
        %v720 = vrot.slane %v711, %v719
        %v721 = vlaneseq
        %v722 = vshrl.u32 %v721, 7
        %v723 = vsub.s32 2, %v722
        %v724 = vrot.slane %v711, %v723
        %725 = vrot.lane.b32.xlu0 %v716, 98
        %v726 = vpop.permute.xlu0 %725
        %727 = vrot.lane.b32.xlu0 %v720, 98
        %v728 = vpop.permute.xlu0 %727
        %729 = vrot.lane.b32.xlu0 %v724, 98
        %v730 = vpop.permute.xlu0 %729
        %vm731 = vcmask 801792
        %v732 = vsel %vm731, %v726, %v728
        %v733 = vsel %vm731, %v728, %v730
        %v736 = vsel %vm295, %v732, 0.0
        %v737 = vsel %vm296, %v733, 0.0
        %v740 = vcombine.low %v736, %v737
        %v742 = vunpack.c.l.s4 1966171168
        %v743 = vunpack.c.0.s8 %v742
        %v744 = vlaneseq
        %v745 = vshrl.u32 %v744, 7
        %v746 = vsub.s32 %v743, %v745
        %v747 = vrot.slane %v740, %v746
        %v749 = vunpack.c.l.s4 1966171168
        %v750 = vunpack.c.0.s8 %v749
        %v751 = vlaneseq
        %v752 = vshrl.u32 %v751, 7
        %v753 = vsub.s32 %v750, %v752
        %v754 = vrot.slane %v747, %v753
        %s756 = scalar_lea.vmem [#allocation3], 18
        %757 = vst.msk [vmem:[%s756] ss:$8 sm:$0x3] %vm307, %v754
        %758 = vst.msk [vmem:[%s756] ss:$8 sm:$0x0] %vm307, %v754
        %v759 = vld [vmem:[#allocation2 + $0x1] sm:$0x7]
        %v761 = vlaneseq
        %v762 = vshrl.u32 %v761, 7
        %v763 = vsub.s32 0, %v762
        %v764 = vrot.slane %v759, %v763
        %v765 = vlaneseq
        %v766 = vshrl.u32 %v765, 7
        %v767 = vsub.s32 1, %v766
        %v768 = vrot.slane %v759, %v767
        %v769 = vlaneseq
        %v770 = vshrl.u32 %v769, 7
        %v771 = vsub.s32 2, %v770
        %v772 = vrot.slane %v759, %v771
        %773 = vrot.lane.b32.xlu0 %v764, 97
        %v774 = vpop.permute.xlu0 %773
        %775 = vrot.lane.b32.xlu0 %v768, 97
        %v776 = vpop.permute.xlu0 %775
        %777 = vrot.lane.b32.xlu0 %v772, 97
        %v778 = vpop.permute.xlu0 %777
        %vm779 = vcmask 793600
        %v780 = vsel %vm779, %v774, %v776
        %v781 = vsel %vm779, %v776, %v778
        %v784 = vsel %vm297, %v780, 0.0
        %v785 = vsel %vm298, %v781, 0.0
        %v788 = vcombine.low %v784, %v785
        %v790 = vunpack.c.l.s4 1966171168
        %v791 = vunpack.c.0.s8 %v790
        %v792 = vlaneseq
        %v793 = vshrl.u32 %v792, 7
        %v794 = vsub.s32 %v791, %v793
        %v795 = vrot.slane %v788, %v794
        %v797 = vunpack.c.l.s4 1966171168
        %v798 = vunpack.c.0.s8 %v797
        %v799 = vlaneseq
        %v800 = vshrl.u32 %v799, 7
        %v801 = vsub.s32 %v798, %v800
        %v802 = vrot.slane %v795, %v801
        %s804 = scalar_lea.vmem [#allocation3], 19
        %805 = vst.msk [vmem:[%s804] ss:$8 sm:$0x3] %vm307, %v802
        %806 = vst.msk [vmem:[%s804] ss:$8 sm:$0x0] %vm307, %v802
        %v807 = vld [vmem:[#allocation2 + $0x1] sm:$0x7]
        %809 = vrot.lane.b32.xlu0 %v807, 96
        %v810 = vpop.permute.xlu0 %809
        %v811 = vrot.slane %v810, 1
        %vm812 = vcmask 785408
        %v813 = vsel %vm812, %v810, %v811
        %s815 = scalar_lea.vmem [#allocation3], 20
        %816 = vst.msk [vmem:[%s815] ss:$8 sm:$0x3] %vm307, %v813
        %817 = vst.msk [vmem:[%s815] ss:$8 sm:$0x0] %vm307, %v813
        %v818 = vld [vmem:[#allocation2 + $0x1] sm:$0x7]
        %v820 = vlaneseq
        %v821 = vshrl.u32 %v820, 7
        %v822 = vsub.s32 0, %v821
        %v823 = vrot.slane %v818, %v822
        %v824 = vlaneseq
        %v825 = vshrl.u32 %v824, 7
        %v826 = vsub.s32 1, %v825
        %v827 = vrot.slane %v818, %v826
        %v828 = vlaneseq
        %v829 = vshrl.u32 %v828, 7
        %v830 = vsub.s32 2, %v829
        %v831 = vrot.slane %v818, %v830
        %832 = vrot.lane.b32.xlu0 %v823, 95
        %v833 = vpop.permute.xlu0 %832
        %834 = vrot.lane.b32.xlu0 %v827, 95
        %v835 = vpop.permute.xlu0 %834
        %836 = vrot.lane.b32.xlu0 %v831, 95
        %v837 = vpop.permute.xlu0 %836
        %vm838 = vcmask 777216
        %v839 = vsel %vm838, %v833, %v835
        %v840 = vsel %vm838, %v835, %v837
        %v843 = vsel %vm299, %v839, 0.0
        %v844 = vsel %vm300, %v840, 0.0
        %v847 = vcombine.low %v843, %v844
        %v849 = vunpack.c.l.s4 1966171168
        %v850 = vunpack.c.0.s8 %v849
        %v851 = vlaneseq
        %v852 = vshrl.u32 %v851, 7
        %v853 = vsub.s32 %v850, %v852
        %v854 = vrot.slane %v847, %v853
        %v856 = vunpack.c.l.s4 1966171168
        %v857 = vunpack.c.0.s8 %v856
        %v858 = vlaneseq
        %v859 = vshrl.u32 %v858, 7
        %v860 = vsub.s32 %v857, %v859
        %v861 = vrot.slane %v854, %v860
        %s863 = scalar_lea.vmem [#allocation3], 21
        %864 = vst.msk [vmem:[%s863] ss:$8 sm:$0x3] %vm307, %v861
        %865 = vst.msk [vmem:[%s863] ss:$8 sm:$0x0] %vm307, %v861
        %v866 = vld [vmem:[#allocation2 + $0x1] sm:$0x7]
        %v868 = vlaneseq
        %v869 = vshrl.u32 %v868, 7
        %v870 = vsub.s32 0, %v869
        %v871 = vrot.slane %v866, %v870
        %v872 = vlaneseq
        %v873 = vshrl.u32 %v872, 7
        %v874 = vsub.s32 1, %v873
        %v875 = vrot.slane %v866, %v874
        %v876 = vlaneseq
        %v877 = vshrl.u32 %v876, 7
        %v878 = vsub.s32 2, %v877
        %v879 = vrot.slane %v866, %v878
        %880 = vrot.lane.b32.xlu0 %v871, 94
        %v881 = vpop.permute.xlu0 %880
        %882 = vrot.lane.b32.xlu0 %v875, 94
        %v883 = vpop.permute.xlu0 %882
        %884 = vrot.lane.b32.xlu0 %v879, 94
        %v885 = vpop.permute.xlu0 %884
        %vm886 = vcmask 769024
        %v887 = vsel %vm886, %v881, %v883
        %v888 = vsel %vm886, %v883, %v885
        %v891 = vsel %vm301, %v887, 0.0
        %v892 = vsel %vm302, %v888, 0.0
        %v895 = vcombine.low %v891, %v892
        %v897 = vunpack.c.l.s4 1966171168
        %v898 = vunpack.c.0.s8 %v897
        %v899 = vlaneseq
        %v900 = vshrl.u32 %v899, 7
        %v901 = vsub.s32 %v898, %v900
        %v902 = vrot.slane %v895, %v901
        %v904 = vunpack.c.l.s4 1966171168
        %v905 = vunpack.c.0.s8 %v904
        %v906 = vlaneseq
        %v907 = vshrl.u32 %v906, 7
        %v908 = vsub.s32 %v905, %v907
        %v909 = vrot.slane %v902, %v908
        %s911 = scalar_lea.vmem [#allocation3], 22
        %912 = vst.msk [vmem:[%s911] ss:$8 sm:$0x3] %vm307, %v909
        %913 = vst.msk [vmem:[%s911] ss:$8 sm:$0x0] %vm307, %v909
        %v914 = vld [vmem:[#allocation2 + $0x1] sm:$0x7]
        %v916 = vlaneseq
        %v917 = vshrl.u32 %v916, 7
        %v918 = vsub.s32 0, %v917
        %v919 = vrot.slane %v914, %v918
        %v920 = vlaneseq
        %v921 = vshrl.u32 %v920, 7
        %v922 = vsub.s32 1, %v921
        %v923 = vrot.slane %v914, %v922
        %v924 = vlaneseq
        %v925 = vshrl.u32 %v924, 7
        %v926 = vsub.s32 2, %v925
        %v927 = vrot.slane %v914, %v926
        %928 = vrot.lane.b32.xlu0 %v919, 82
        %v929 = vpop.permute.xlu0 %928
        %930 = vrot.lane.b32.xlu0 %v923, 82
        %v931 = vpop.permute.xlu0 %930
        %932 = vrot.lane.b32.xlu0 %v927, 82
        %v933 = vpop.permute.xlu0 %932
        %vm934 = vcmask 670720
        %v935 = vsel %vm934, %v929, %v931
        %v936 = vsel %vm934, %v931, %v933
        %v939 = vsel %vm295, %v935, 0.0
        %v940 = vsel %vm296, %v936, 0.0
        %v943 = vcombine.low %v939, %v940
        %v945 = vunpack.c.l.s4 1966171168
        %v946 = vunpack.c.0.s8 %v945
        %v947 = vlaneseq
        %v948 = vshrl.u32 %v947, 7
        %v949 = vsub.s32 %v946, %v948
        %v950 = vrot.slane %v943, %v949
        %v952 = vunpack.c.l.s4 1966171168
        %v953 = vunpack.c.0.s8 %v952
        %v954 = vlaneseq
        %v955 = vshrl.u32 %v954, 7
        %v956 = vsub.s32 %v953, %v955
        %v957 = vrot.slane %v950, %v956
        %s959 = scalar_lea.vmem [#allocation3], 23
        %960 = vst.msk [vmem:[%s959] ss:$8 sm:$0x3] %vm307, %v957
        %961 = vst.msk [vmem:[%s959] ss:$8 sm:$0x0] %vm307, %v957
        %v962 = vld [vmem:[#allocation2 + $0x1] sm:$0x7]
        %v964 = vlaneseq
        %v965 = vshrl.u32 %v964, 7
        %v966 = vsub.s32 0, %v965
        %v967 = vrot.slane %v962, %v966
        %v968 = vlaneseq
        %v969 = vshrl.u32 %v968, 7
        %v970 = vsub.s32 1, %v969
        %v971 = vrot.slane %v962, %v970
        %v972 = vlaneseq
        %v973 = vshrl.u32 %v972, 7
        %v974 = vsub.s32 2, %v973
        %v975 = vrot.slane %v962, %v974
        %976 = vrot.lane.b32.xlu0 %v967, 81
        %v977 = vpop.permute.xlu0 %976
        %978 = vrot.lane.b32.xlu0 %v971, 81
        %v979 = vpop.permute.xlu0 %978
        %980 = vrot.lane.b32.xlu0 %v975, 81
        %v981 = vpop.permute.xlu0 %980
        %vm982 = vcmask 662528
        %v983 = vsel %vm982, %v977, %v979
        %v984 = vsel %vm982, %v979, %v981
        %v987 = vsel %vm297, %v983, 0.0
        %v988 = vsel %vm298, %v984, 0.0
        %v991 = vcombine.low %v987, %v988
        %v993 = vunpack.c.l.s4 1966171168
        %v994 = vunpack.c.0.s8 %v993
        %v995 = vlaneseq
        %v996 = vshrl.u32 %v995, 7
        %v997 = vsub.s32 %v994, %v996
        %v998 = vrot.slane %v991, %v997
        %v1000 = vunpack.c.l.s4 1966171168
        %v1001 = vunpack.c.0.s8 %v1000
        %v1002 = vlaneseq
        %v1003 = vshrl.u32 %v1002, 7
        %v1004 = vsub.s32 %v1001, %v1003
        %v1005 = vrot.slane %v998, %v1004
        %s1007 = scalar_lea.vmem [#allocation3], 32
        %1008 = vst.msk [vmem:[%s1007] ss:$8 sm:$0x3] %vm307, %v1005
        %1009 = vst.msk [vmem:[%s1007] ss:$8 sm:$0x0] %vm307, %v1005
        %v1010 = vld [vmem:[#allocation2 + $0x1] sm:$0x7]
        %1012 = vrot.lane.b32.xlu0 %v1010, 80
        %v1013 = vpop.permute.xlu0 %1012
        %v1014 = vrot.slane %v1013, 1
        %vm1015 = vcmask 654336
        %v1016 = vsel %vm1015, %v1013, %v1014
        %s1018 = scalar_lea.vmem [#allocation3], 33
        %1019 = vst.msk [vmem:[%s1018] ss:$8 sm:$0x3] %vm307, %v1016
        %1020 = vst.msk [vmem:[%s1018] ss:$8 sm:$0x0] %vm307, %v1016
        %v1021 = vld [vmem:[#allocation2 + $0x1] sm:$0x7]
        %v1023 = vlaneseq
        %v1024 = vshrl.u32 %v1023, 7
        %v1025 = vsub.s32 0, %v1024
        %v1026 = vrot.slane %v1021, %v1025
        %v1027 = vlaneseq
        %v1028 = vshrl.u32 %v1027, 7
        %v1029 = vsub.s32 1, %v1028
        %v1030 = vrot.slane %v1021, %v1029
        %v1031 = vlaneseq
        %v1032 = vshrl.u32 %v1031, 7
        %v1033 = vsub.s32 2, %v1032
        %v1034 = vrot.slane %v1021, %v1033
        %1035 = vrot.lane.b32.xlu0 %v1026, 79
        %v1036 = vpop.permute.xlu0 %1035
        %1037 = vrot.lane.b32.xlu0 %v1030, 79
        %v1038 = vpop.permute.xlu0 %1037
        %1039 = vrot.lane.b32.xlu0 %v1034, 79
        %v1040 = vpop.permute.xlu0 %1039
        %vm1041 = vcmask 646144
        %v1042 = vsel %vm1041, %v1036, %v1038
        %v1043 = vsel %vm1041, %v1038, %v1040
        %v1046 = vsel %vm299, %v1042, 0.0
        %v1047 = vsel %vm300, %v1043, 0.0
        %v1050 = vcombine.low %v1046, %v1047
        %v1052 = vunpack.c.l.s4 1966171168
        %v1053 = vunpack.c.0.s8 %v1052
        %v1054 = vlaneseq
        %v1055 = vshrl.u32 %v1054, 7
        %v1056 = vsub.s32 %v1053, %v1055
        %v1057 = vrot.slane %v1050, %v1056
        %v1059 = vunpack.c.l.s4 1966171168
        %v1060 = vunpack.c.0.s8 %v1059
        %v1061 = vlaneseq
        %v1062 = vshrl.u32 %v1061, 7
        %v1063 = vsub.s32 %v1060, %v1062
        %v1064 = vrot.slane %v1057, %v1063
        %s1066 = scalar_lea.vmem [#allocation3], 34
        %1067 = vst.msk [vmem:[%s1066] ss:$8 sm:$0x3] %vm307, %v1064
        %1068 = vst.msk [vmem:[%s1066] ss:$8 sm:$0x0] %vm307, %v1064
        %v1069 = vld [vmem:[#allocation2 + $0x1] sm:$0x7]
        %v1071 = vlaneseq
        %v1072 = vshrl.u32 %v1071, 7
        %v1073 = vsub.s32 0, %v1072
        %v1074 = vrot.slane %v1069, %v1073
        %v1075 = vlaneseq
        %v1076 = vshrl.u32 %v1075, 7
        %v1077 = vsub.s32 1, %v1076
        %v1078 = vrot.slane %v1069, %v1077
        %v1079 = vlaneseq
        %v1080 = vshrl.u32 %v1079, 7
        %v1081 = vsub.s32 2, %v1080
        %v1082 = vrot.slane %v1069, %v1081
        %1083 = vrot.lane.b32.xlu0 %v1074, 78
        %v1084 = vpop.permute.xlu0 %1083
        %1085 = vrot.lane.b32.xlu0 %v1078, 78
        %v1086 = vpop.permute.xlu0 %1085
        %1087 = vrot.lane.b32.xlu0 %v1082, 78
        %v1088 = vpop.permute.xlu0 %1087
        %vm1089 = vcmask 637952
        %v1090 = vsel %vm1089, %v1084, %v1086
        %v1091 = vsel %vm1089, %v1086, %v1088
        %v1094 = vsel %vm301, %v1090, 0.0
        %v1095 = vsel %vm302, %v1091, 0.0
        %v1098 = vcombine.low %v1094, %v1095
        %v1100 = vunpack.c.l.s4 1966171168
        %v1101 = vunpack.c.0.s8 %v1100
        %v1102 = vlaneseq
        %v1103 = vshrl.u32 %v1102, 7
        %v1104 = vsub.s32 %v1101, %v1103
        %v1105 = vrot.slane %v1098, %v1104
        %v1107 = vunpack.c.l.s4 1966171168
        %v1108 = vunpack.c.0.s8 %v1107
        %v1109 = vlaneseq
        %v1110 = vshrl.u32 %v1109, 7
        %v1111 = vsub.s32 %v1108, %v1110
        %v1112 = vrot.slane %v1105, %v1111
        %s1114 = scalar_lea.vmem [#allocation3], 35
        %1115 = vst.msk [vmem:[%s1114] ss:$8 sm:$0x3] %vm307, %v1112
        %1116 = vst.msk [vmem:[%s1114] ss:$8 sm:$0x0] %vm307, %v1112
        %v1117 = vld [vmem:[#allocation2 + $0x1] sm:$0x7]
        %v1119 = vlaneseq
        %v1120 = vshrl.u32 %v1119, 7
        %v1121 = vsub.s32 0, %v1120
        %v1122 = vrot.slane %v1117, %v1121
        %v1123 = vlaneseq
        %v1124 = vshrl.u32 %v1123, 7
        %v1125 = vsub.s32 1, %v1124
        %v1126 = vrot.slane %v1117, %v1125
        %v1127 = vlaneseq
        %v1128 = vshrl.u32 %v1127, 7
        %v1129 = vsub.s32 2, %v1128
        %v1130 = vrot.slane %v1117, %v1129
        %1131 = vrot.lane.b32.xlu0 %v1122, 66
        %v1132 = vpop.permute.xlu0 %1131
        %1133 = vrot.lane.b32.xlu0 %v1126, 66
        %v1134 = vpop.permute.xlu0 %1133
        %1135 = vrot.lane.b32.xlu0 %v1130, 66
        %v1136 = vpop.permute.xlu0 %1135
        %vm1137 = vcmask 539648
        %v1138 = vsel %vm1137, %v1132, %v1134
        %v1139 = vsel %vm1137, %v1134, %v1136
        %v1142 = vsel %vm295, %v1138, 0.0
        %v1143 = vsel %vm296, %v1139, 0.0
        %v1146 = vcombine.low %v1142, %v1143
        %v1148 = vunpack.c.l.s4 1966171168
        %v1149 = vunpack.c.0.s8 %v1148
        %v1150 = vlaneseq
        %v1151 = vshrl.u32 %v1150, 7
        %v1152 = vsub.s32 %v1149, %v1151
        %v1153 = vrot.slane %v1146, %v1152
        %v1155 = vunpack.c.l.s4 1966171168
        %v1156 = vunpack.c.0.s8 %v1155
        %v1157 = vlaneseq
        %v1158 = vshrl.u32 %v1157, 7
        %v1159 = vsub.s32 %v1156, %v1158
        %v1160 = vrot.slane %v1153, %v1159
        %s1162 = scalar_lea.vmem [#allocation3], 36
        %1163 = vst.msk [vmem:[%s1162] ss:$8 sm:$0x3] %vm307, %v1160
        %1164 = vst.msk [vmem:[%s1162] ss:$8 sm:$0x0] %vm307, %v1160
        %v1165 = vld [vmem:[#allocation2 + $0x1] sm:$0x7]
        %v1167 = vlaneseq
        %v1168 = vshrl.u32 %v1167, 7
        %v1169 = vsub.s32 0, %v1168
        %v1170 = vrot.slane %v1165, %v1169
        %v1171 = vlaneseq
        %v1172 = vshrl.u32 %v1171, 7
        %v1173 = vsub.s32 1, %v1172
        %v1174 = vrot.slane %v1165, %v1173
        %v1175 = vlaneseq
        %v1176 = vshrl.u32 %v1175, 7
        %v1177 = vsub.s32 2, %v1176
        %v1178 = vrot.slane %v1165, %v1177
        %1179 = vrot.lane.b32.xlu0 %v1170, 65
        %v1180 = vpop.permute.xlu0 %1179
        %1181 = vrot.lane.b32.xlu0 %v1174, 65
        %v1182 = vpop.permute.xlu0 %1181
        %1183 = vrot.lane.b32.xlu0 %v1178, 65
        %v1184 = vpop.permute.xlu0 %1183
        %vm1185 = vcmask 531456
        %v1186 = vsel %vm1185, %v1180, %v1182
        %v1187 = vsel %vm1185, %v1182, %v1184
        %v1190 = vsel %vm297, %v1186, 0.0
        %v1191 = vsel %vm298, %v1187, 0.0
        %v1194 = vcombine.low %v1190, %v1191
        %v1196 = vunpack.c.l.s4 1966171168
        %v1197 = vunpack.c.0.s8 %v1196
        %v1198 = vlaneseq
        %v1199 = vshrl.u32 %v1198, 7
        %v1200 = vsub.s32 %v1197, %v1199
        %v1201 = vrot.slane %v1194, %v1200
        %v1203 = vunpack.c.l.s4 1966171168
        %v1204 = vunpack.c.0.s8 %v1203
        %v1205 = vlaneseq
        %v1206 = vshrl.u32 %v1205, 7
        %v1207 = vsub.s32 %v1204, %v1206
        %v1208 = vrot.slane %v1201, %v1207
        %s1210 = scalar_lea.vmem [#allocation3], 37
        %1211 = vst.msk [vmem:[%s1210] ss:$8 sm:$0x3] %vm307, %v1208
        %1212 = vst.msk [vmem:[%s1210] ss:$8 sm:$0x0] %vm307, %v1208
        %v1213 = vld [vmem:[#allocation2 + $0x1] sm:$0x7]
        %1215 = vrot.lane.b32.xlu0 %v1213, 64
        %v1216 = vpop.permute.xlu0 %1215
        %v1217 = vrot.slane %v1216, 1
        %vm1218 = vcmask 523264
        %v1219 = vsel %vm1218, %v1216, %v1217
        %s1221 = scalar_lea.vmem [#allocation3], 38
        %1222 = vst.msk [vmem:[%s1221] ss:$8 sm:$0x3] %vm307, %v1219
        %1223 = vst.msk [vmem:[%s1221] ss:$8 sm:$0x0] %vm307, %v1219
        %v1224 = vld [vmem:[#allocation2 + $0x1] sm:$0x7]
        %v1226 = vlaneseq
        %v1227 = vshrl.u32 %v1226, 7
        %v1228 = vsub.s32 0, %v1227
        %v1229 = vrot.slane %v1224, %v1228
        %v1230 = vlaneseq
        %v1231 = vshrl.u32 %v1230, 7
        %v1232 = vsub.s32 1, %v1231
        %v1233 = vrot.slane %v1224, %v1232
        %v1234 = vlaneseq
        %v1235 = vshrl.u32 %v1234, 7
        %v1236 = vsub.s32 2, %v1235
        %v1237 = vrot.slane %v1224, %v1236
        %1238 = vrot.lane.b32.xlu0 %v1229, 63
        %v1239 = vpop.permute.xlu0 %1238
        %1240 = vrot.lane.b32.xlu0 %v1233, 63
        %v1241 = vpop.permute.xlu0 %1240
        %1242 = vrot.lane.b32.xlu0 %v1237, 63
        %v1243 = vpop.permute.xlu0 %1242
        %vm1244 = vcmask 515072
        %v1245 = vsel %vm1244, %v1239, %v1241
        %v1246 = vsel %vm1244, %v1241, %v1243
        %v1249 = vsel %vm299, %v1245, 0.0
        %v1250 = vsel %vm300, %v1246, 0.0
        %v1253 = vcombine.low %v1249, %v1250
        %v1255 = vunpack.c.l.s4 1966171168
        %v1256 = vunpack.c.0.s8 %v1255
        %v1257 = vlaneseq
        %v1258 = vshrl.u32 %v1257, 7
        %v1259 = vsub.s32 %v1256, %v1258
        %v1260 = vrot.slane %v1253, %v1259
        %v1262 = vunpack.c.l.s4 1966171168
        %v1263 = vunpack.c.0.s8 %v1262
        %v1264 = vlaneseq
        %v1265 = vshrl.u32 %v1264, 7
        %v1266 = vsub.s32 %v1263, %v1265
        %v1267 = vrot.slane %v1260, %v1266
        %s1269 = scalar_lea.vmem [#allocation3], 39
        %1270 = vst.msk [vmem:[%s1269] ss:$8 sm:$0x3] %vm307, %v1267
        %1271 = vst.msk [vmem:[%s1269] ss:$8 sm:$0x0] %vm307, %v1267
        %v1272 = vld [vmem:[#allocation2 + $0x1] sm:$0x7]
        %v1274 = vlaneseq
        %v1275 = vshrl.u32 %v1274, 7
        %v1276 = vsub.s32 0, %v1275
        %v1277 = vrot.slane %v1272, %v1276
        %v1278 = vlaneseq
        %v1279 = vshrl.u32 %v1278, 7
        %v1280 = vsub.s32 1, %v1279
        %v1281 = vrot.slane %v1272, %v1280
        %v1282 = vlaneseq
        %v1283 = vshrl.u32 %v1282, 7
        %v1284 = vsub.s32 2, %v1283
        %v1285 = vrot.slane %v1272, %v1284
        %1286 = vrot.lane.b32.xlu0 %v1277, 62
        %v1287 = vpop.permute.xlu0 %1286
        %1288 = vrot.lane.b32.xlu0 %v1281, 62
        %v1289 = vpop.permute.xlu0 %1288
        %1290 = vrot.lane.b32.xlu0 %v1285, 62
        %v1291 = vpop.permute.xlu0 %1290
        %vm1292 = vcmask 506880
        %v1293 = vsel %vm1292, %v1287, %v1289
        %v1294 = vsel %vm1292, %v1289, %v1291
        %v1297 = vsel %vm301, %v1293, 0.0
        %v1298 = vsel %vm302, %v1294, 0.0
        %v1301 = vcombine.low %v1297, %v1298
        %v1303 = vunpack.c.l.s4 1966171168
        %v1304 = vunpack.c.0.s8 %v1303
        %v1305 = vlaneseq
        %v1306 = vshrl.u32 %v1305, 7
        %v1307 = vsub.s32 %v1304, %v1306
        %v1308 = vrot.slane %v1301, %v1307
        %v1310 = vunpack.c.l.s4 1966171168
        %v1311 = vunpack.c.0.s8 %v1310
        %v1312 = vlaneseq
        %v1313 = vshrl.u32 %v1312, 7
        %v1314 = vsub.s32 %v1311, %v1313
        %v1315 = vrot.slane %v1308, %v1314
        %s1317 = scalar_lea.vmem [#allocation3], 48
        %1318 = vst.msk [vmem:[%s1317] ss:$8 sm:$0x3] %vm307, %v1315
        %1319 = vst.msk [vmem:[%s1317] ss:$8 sm:$0x0] %vm307, %v1315
        %v1320 = vld [vmem:[#allocation9] sm:$0xff]
        %v1321 = vld [vmem:[#allocation9 + $0x8] sm:$0xff]
        %v1322 = vld [vmem:[#allocation9 + $0x10] sm:$0xff]
        %v1323 = vld [vmem:[#allocation9 + $0x18] sm:$0x3f]
        %v1324 = vld [vmem:[#allocation3] sm:$0xff]
        %v1325 = vld [vmem:[#allocation3 + $0x8] sm:$0xff]
        %v1326 = vld [vmem:[#allocation3 + $0x10] sm:$0xff]
        %v1327 = vld [vmem:[#allocation3 + $0x18] sm:$0xff]
        %v1328 = vld [vmem:[#allocation3 + $0x20] sm:$0xff]
        %v1329 = vld [vmem:[#allocation3 + $0x28] sm:$0xff]
        %v1330 = vld [vmem:[#allocation3 + $0x30] sm:$0x1]
        %v1331 = vld [vmem:[#allocation3 + $0x38] sm:$0x1]
        %vm1332 = vcmask 203776
        %v1334 = vsel %vm1332, %v1320, 0
        %v1337 = vsel %vm1332, %v1321, 0
        %v1340 = vsel %vm1332, %v1322, 0
        %v1343 = vsel %vm1332, %v1323, 0
        %vm1345 = vcmask 1040384
        %v1347 = vsel %vm1345, %v1330, 0
        %v1350 = vsel %vm1345, %v1331, 0
        %1352 = vmatprep.subr.mxu0 %v1325
        %1353 = vmatpush1.msra.mxu0 %v1324
        %1354 = vmatprep.subr.mxu0 %v1327
        %1355 = vmatpush1.msra.mxu0 %v1326
        %1356 = vmatprep.subr.mxu0 %v1329
        %1357 = vmatpush1.msra.mxu0 %v1328
        %1358 = vmatprep.subr.mxu0 %v1350
        %1359 = vmatpush1.msra.mxu0 %v1347
        %1360 = vmatprep.subr.mxu0 0.0
        %1361 = vmatpush1.msra.mxu0 0.0
        %1362 = vmatprep.subr.mxu0 0.0
        %1363 = vmatpush1.msra.mxu0 0.0
        %1364 = vmatprep.subr.mxu0 0.0
        %1365 = vmatpush1.msra.mxu0 0.0
        %1366 = vmatprep.subr.mxu0 0.0
        %1367 = vmatpush1.msra.mxu0 0.0
        %1368 = vmatprep.subr.mxu0 0.0
        %1369 = vmatpush1.msra.mxu0 0.0
        %1370 = vmatprep.subr.mxu0 0.0
        %1371 = vmatpush1.msra.mxu0 0.0
        %1372 = vmatprep.subr.mxu0 0.0
        %1373 = vmatpush1.msra.mxu0 0.0
        %1374 = vmatprep.subr.mxu0 0.0
        %1375 = vmatpush1.msra.mxu0 0.0
        %1376 = vmatprep.subr.mxu0 0.0
        %1377 = vmatpush1.msra.mxu0 0.0
        %1378 = vmatprep.subr.mxu0 0.0
        %1379 = vmatpush1.msra.mxu0 0.0
        %1380 = vmatprep.subr.mxu0 0.0
        %1381 = vmatpush1.msra.mxu0 0.0
        %1382 = vmatprep.subr.mxu0 0.0
        %1383 = vmatpush1.msra.mxu0 0.0
        %1384 = vmatprep.subr.mxu0 0.0
        %1385 = vmatpush1.msra.mxu0 0.0
        %1386 = vmatprep.subr.mxu0 0.0
        %1387 = vmatpush1.msra.mxu0 0.0
        %1388 = vmatprep.subr.mxu0 0.0
        %1389 = vmatpush1.msra.mxu0 0.0
        %1390 = vmatprep.subr.mxu0 0.0
        %1391 = vmatpush1.msra.mxu0 0.0
        %1392 = vmatprep.subr.mxu0 0.0
        %1393 = vmatpush1.msra.mxu0 0.0
        %1394 = vmatprep.subr.mxu0 0.0
        %1395 = vmatpush1.msra.mxu0 0.0
        %1396 = vmatprep.subr.mxu0 0.0
        %1397 = vmatpush1.msra.mxu0 0.0
        %1398 = vmatprep.subr.mxu0 0.0
        %1399 = vmatpush1.msra.mxu0 0.0
        %1400 = vmatprep.subr.mxu0 0.0
        %1401 = vmatpush1.msra.mxu0 0.0
        %1402 = vmatprep.subr.mxu0 0.0
        %1403 = vmatpush1.msra.mxu0 0.0
        %1404 = vmatprep.subr.mxu0 0.0
        %1405 = vmatpush1.msra.mxu0 0.0
        %1406 = vmatprep.subr.mxu0 0.0
        %1407 = vmatpush1.msra.mxu0 0.0
        %1408 = vmatprep.subr.mxu0 0.0
        %1409 = vmatpush1.msra.mxu0 0.0
        %1410 = vmatprep.subr.mxu0 0.0
        %1411 = vmatpush1.msra.mxu0 0.0
        %1412 = vmatprep.subr.mxu0 0.0
        %1413 = vmatpush1.msra.mxu0 0.0
        %1414 = vmatprep.subr.mxu0 0.0
        %1415 = vmatpush1.msra.mxu0 0.0
        %1416 = vmatprep.mubr.f32.mxu0 0.0
        %1417 = vmatmul.mubr.f32.gmra.mrb[0].mxu0 %v1334
        %v1418 = vpop.f32.mrb[0].mxu0
        %v1419 = vadd.f32 0.0, %v1418
        %v1420 = vpop.f32.mrb[0].mxu0
        %v1421 = vadd.f32 0.0, %v1420
        %1422 = vmatprep.mubr.f32.mxu0 0.0
        %1423 = vmatmul.mubr.f32.gmra.mrb[0].mxu0 %v1337
        %v1424 = vpop.f32.mrb[0].mxu0
        %v1425 = vadd.f32 0.0, %v1424
        %v1426 = vpop.f32.mrb[0].mxu0
        %v1427 = vadd.f32 0.0, %v1426
        %1428 = vmatprep.mubr.f32.mxu0 0.0
        %1429 = vmatmul.mubr.f32.gmra.mrb[0].mxu0 %v1340
        %v1430 = vpop.f32.mrb[0].mxu0
        %v1431 = vadd.f32 0.0, %v1430
        %v1432 = vpop.f32.mrb[0].mxu0
        %v1433 = vadd.f32 0.0, %v1432
        %1434 = vmatprep.mubr.f32.mxu0 0.0
        %1435 = vmatmul.mubr.f32.gmra.mrb[0].mxu0 %v1343
        %v1436 = vpop.f32.mrb[0].mxu0
        %v1437 = vadd.f32 0.0, %v1436
        %v1438 = vpop.f32.mrb[0].mxu0
        %v1439 = vadd.f32 0.0, %v1438
        %1440 = vdwg.mxu0
        %v1441 = vrot.slane %v1419, 4
        %v1442 = vmax.f32 %v1419, %v1441
        %v1443 = vrot.slane %v1442, 2
        %v1444 = vmax.f32 %v1442, %v1443
        %v1445 = vrot.slane %v1444, 1
        %v1446 = vmax.f32 %v1444, %v1445
        %v1447 = vrot.slane %v1421, 4
        %v1448 = vmax.f32 %v1421, %v1447
        %v1449 = vrot.slane %v1448, 2
        %v1450 = vmax.f32 %v1448, %v1449
        %v1451 = vrot.slane %v1450, 1
        %v1452 = vmax.f32 %v1450, %v1451
        %vm1453 = vcmask 1043456
        %v1454 = vsel %vm1453, %v1425, -inf
        %v1455 = vrot.slane %v1454, 4
        %v1456 = vmax.f32 %v1454, %v1455
        %v1457 = vrot.slane %v1456, 2
        %v1458 = vmax.f32 %v1456, %v1457
        %v1459 = vrot.slane %v1458, 1
        %v1460 = vmax.f32 %v1458, %v1459
        %v1461 = vsel %vm1453, %v1427, -inf
        %v1462 = vrot.slane %v1461, 4
        %v1463 = vmax.f32 %v1461, %v1462
        %v1464 = vrot.slane %v1463, 2
        %v1465 = vmax.f32 %v1463, %v1464
        %v1466 = vrot.slane %v1465, 1
        %v1467 = vmax.f32 %v1465, %v1466
        %vm1468 = vcmask 1047556
        %v1469 = vsel %vm1468, %v1425, -inf
        %v1470 = vsel %vm1453, %v1431, -inf
        %v1471 = vmax.f32 %v1469, %v1470
        %v1472 = vrot.slane %v1471, 4
        %v1473 = vmax.f32 %v1471, %v1472
        %v1474 = vrot.slane %v1473, 2
        %v1475 = vmax.f32 %v1473, %v1474
        %v1476 = vrot.slane %v1475, 1
        %v1477 = vmax.f32 %v1475, %v1476
        %v1478 = vsel %vm1468, %v1427, -inf
        %v1479 = vsel %vm1453, %v1433, -inf
        %v1480 = vmax.f32 %v1478, %v1479
        %v1481 = vrot.slane %v1480, 4
        %v1482 = vmax.f32 %v1480, %v1481
        %v1483 = vrot.slane %v1482, 2
        %v1484 = vmax.f32 %v1482, %v1483
        %v1485 = vrot.slane %v1484, 1
        %v1486 = vmax.f32 %v1484, %v1485
        %v1487 = vsel %vm1468, %v1431, -inf
        %v1488 = vsel %vm1345, %v1437, -inf
        %v1489 = vmax.f32 %v1487, %v1488
        %v1490 = vrot.slane %v1489, 4
        %v1491 = vmax.f32 %v1489, %v1490
        %v1492 = vrot.slane %v1491, 2
        %v1493 = vmax.f32 %v1491, %v1492
        %v1494 = vrot.slane %v1493, 1
        %v1495 = vmax.f32 %v1493, %v1494
        %v1496 = vsel %vm1468, %v1433, -inf
        %v1497 = vsel %vm1345, %v1439, -inf
        %v1498 = vmax.f32 %v1496, %v1497
        %v1499 = vrot.slane %v1498, 4
        %v1500 = vmax.f32 %v1498, %v1499
        %v1501 = vrot.slane %v1500, 2
        %v1502 = vmax.f32 %v1500, %v1501
        %v1503 = vrot.slane %v1502, 1
        %v1504 = vmax.f32 %v1502, %v1503
        %vm1505 = vcmask 1045505
        %v1506 = vsel %vm1505, %v1437, -inf
        %v1507 = vrot.slane %v1506, 4
        %v1508 = vmax.f32 %v1506, %v1507
        %v1509 = vrot.slane %v1508, 2
        %v1510 = vmax.f32 %v1508, %v1509
        %v1511 = vrot.slane %v1510, 1
        %v1512 = vmax.f32 %v1510, %v1511
        %v1513 = vsel %vm1505, %v1439, -inf
        %v1514 = vrot.slane %v1513, 4
        %v1515 = vmax.f32 %v1513, %v1514
        %v1516 = vrot.slane %v1515, 2
        %v1517 = vmax.f32 %v1515, %v1516
        %v1518 = vrot.slane %v1517, 1
        %v1519 = vmax.f32 %v1517, %v1518
        %v1520 = vsel %vm1345, %v1446, %v1460
        %v1521 = vsel %vm1345, %v1452, %v1467
        %vm1522 = vcmask 1041408
        %v1523 = vsel %vm1522, %v1520, %v1477
        %v1524 = vsel %vm1522, %v1521, %v1486
        %vm1525 = vcmask 1042432
        %v1526 = vsel %vm1525, %v1523, %v1495
        %v1527 = vsel %vm1525, %v1524, %v1504
        %v1528 = vsel %vm1453, %v1526, %v1512
        %v1529 = vsel %vm1453, %v1527, %v1519
        %v1530 = vrot.slane %v1419, 4
        %v1531 = vmin.f32 %v1419, %v1530
        %v1532 = vrot.slane %v1531, 2
        %v1533 = vmin.f32 %v1531, %v1532
        %v1534 = vrot.slane %v1533, 1
        %v1535 = vmin.f32 %v1533, %v1534
        %v1536 = vrot.slane %v1421, 4
        %v1537 = vmin.f32 %v1421, %v1536
        %v1538 = vrot.slane %v1537, 2
        %v1539 = vmin.f32 %v1537, %v1538
        %v1540 = vrot.slane %v1539, 1
        %v1541 = vmin.f32 %v1539, %v1540
        %v1542 = vsel %vm1453, %v1425, inf
        %v1543 = vrot.slane %v1542, 4
        %v1544 = vmin.f32 %v1542, %v1543
        %v1545 = vrot.slane %v1544, 2
        %v1546 = vmin.f32 %v1544, %v1545
        %v1547 = vrot.slane %v1546, 1
        %v1548 = vmin.f32 %v1546, %v1547
        %v1549 = vsel %vm1453, %v1427, inf
        %v1550 = vrot.slane %v1549, 4
        %v1551 = vmin.f32 %v1549, %v1550
        %v1552 = vrot.slane %v1551, 2
        %v1553 = vmin.f32 %v1551, %v1552
        %v1554 = vrot.slane %v1553, 1
        %v1555 = vmin.f32 %v1553, %v1554
        %v1556 = vsel %vm1468, %v1425, inf
        %v1557 = vsel %vm1453, %v1431, inf
        %v1558 = vmin.f32 %v1556, %v1557
        %v1559 = vrot.slane %v1558, 4
        %v1560 = vmin.f32 %v1558, %v1559
        %v1561 = vrot.slane %v1560, 2
        %v1562 = vmin.f32 %v1560, %v1561
        %v1563 = vrot.slane %v1562, 1
        %v1564 = vmin.f32 %v1562, %v1563
        %v1565 = vsel %vm1468, %v1427, inf
        %v1566 = vsel %vm1453, %v1433, inf
        %v1567 = vmin.f32 %v1565, %v1566
        %v1568 = vrot.slane %v1567, 4
        %v1569 = vmin.f32 %v1567, %v1568
        %v1570 = vrot.slane %v1569, 2
        %v1571 = vmin.f32 %v1569, %v1570
        %v1572 = vrot.slane %v1571, 1
        %v1573 = vmin.f32 %v1571, %v1572
        %v1574 = vsel %vm1468, %v1431, inf
        %v1575 = vsel %vm1345, %v1437, inf
        %v1576 = vmin.f32 %v1574, %v1575
        %v1577 = vrot.slane %v1576, 4
        %v1578 = vmin.f32 %v1576, %v1577
        %v1579 = vrot.slane %v1578, 2
        %v1580 = vmin.f32 %v1578, %v1579
        %v1581 = vrot.slane %v1580, 1
        %v1582 = vmin.f32 %v1580, %v1581
        %v1583 = vsel %vm1468, %v1433, inf
        %v1584 = vsel %vm1345, %v1439, inf
        %v1585 = vmin.f32 %v1583, %v1584
        %v1586 = vrot.slane %v1585, 4
        %v1587 = vmin.f32 %v1585, %v1586
        %v1588 = vrot.slane %v1587, 2
        %v1589 = vmin.f32 %v1587, %v1588
        %v1590 = vrot.slane %v1589, 1
        %v1591 = vmin.f32 %v1589, %v1590
        %v1592 = vsel %vm1505, %v1437, inf
        %v1593 = vrot.slane %v1592, 4
        %v1594 = vmin.f32 %v1592, %v1593
        %v1595 = vrot.slane %v1594, 2
        %v1596 = vmin.f32 %v1594, %v1595
        %v1597 = vrot.slane %v1596, 1
        %v1598 = vmin.f32 %v1596, %v1597
        %v1599 = vsel %vm1505, %v1439, inf
        %v1600 = vrot.slane %v1599, 4
        %v1601 = vmin.f32 %v1599, %v1600
        %v1602 = vrot.slane %v1601, 2
        %v1603 = vmin.f32 %v1601, %v1602
        %v1604 = vrot.slane %v1603, 1
        %v1605 = vmin.f32 %v1603, %v1604
        %v1606 = vsel %vm1345, %v1535, %v1548
        %v1607 = vsel %vm1345, %v1541, %v1555
        %v1608 = vsel %vm1522, %v1606, %v1564
        %v1609 = vsel %vm1522, %v1607, %v1573
        %v1610 = vsel %vm1525, %v1608, %v1582
        %v1611 = vsel %vm1525, %v1609, %v1591
        %v1612 = vsel %vm1453, %v1610, %v1598
        %v1613 = vsel %vm1453, %v1611, %v1605
        %1614 = vst [vmem:[%s263] sm:$0xff] %v1419
        %1615 = vst [vmem:[%s263 + $0x8] sm:$0xff] %v1421
        %1616 = vst [vmem:[%s263 + $0x10] sm:$0xff] %v1425
        %1617 = vst [vmem:[%s263 + $0x18] sm:$0xff] %v1427
        %1618 = vst [vmem:[%s263 + $0x20] sm:$0xff] %v1431
        %1619 = vst [vmem:[%s263 + $0x28] sm:$0xff] %v1433
        %1620 = vst [vmem:[%s263 + $0x30] sm:$0x3f] %v1437
        %1621 = vst [vmem:[%s263 + $0x38] sm:$0x3f] %v1439
        %v1624 = vrot.slane %v1528, 2
        %v1625 = vrot.slane %v1529, 2
        %1628 = vst [vmem:[%s263 + $0x30] sm:$0xc0] %v1624
        %1629 = vst [vmem:[%s263 + $0x38] sm:$0xc0] %v1625
        %1630 = vst [vmem:[%s263 + $0x40] sm:$0x7] %v1624
        %1631 = vst [vmem:[%s263 + $0x48] sm:$0x7] %v1625
        %v1634 = vrot.slane %v1612, 5
        %v1635 = vrot.slane %v1613, 5
        %1638 = vst [vmem:[%s263 + $0x40] sm:$0xf8] %v1634
        %1639 = vst [vmem:[%s263 + $0x48] sm:$0xf8] %v1635
        %s1640 = sand.u32 %s124, 1
        %s1641 = scalar_lea.sflag [#allocation6], %s1640
        %s1642 = sand.u32 %s124, 1
        %s1643 = smul.addr %s1642, 80
        %s1644 = scalar_lea.vmem [#allocation10], %s1643
        // Predicated region
        $region45: #{tpu_custom_call.1} parent=31 // pred_check
          %p1645 = pneg %p134
        $region46: #{tpu_custom_call.1} parent=31 // pred_check_branch
          %1647 = sbr.rel (%p1645) target = $region48
        $region47: #{tpu_custom_call.1} parent=31 // pred_region
          %s1648 = smul.u32 2, %s28
          %s1650 = ssub.s32 1280, 1280
          %1651 = vsyncadd %s1641, %s1650
          %s1652 = smul.addr %s27, 10
          %s1653 = sadd.s32 %s1648, %s1652
          %s1654 = smul.addr %s1653, 128
          %s1655 = scalar_lea.hbm %s3, %s1654
          %s1656 = sshll.u32 %s1644, 4
          %s1657 = int_to_ptr.vmem [resolvable:$true] %s1656
          %1662 = dma.vmem_to_hbm [thread:$0]  %s1657, 1280, %s1655, %s1641, 256, 256, 16
        $region48: #{tpu_custom_call.1} parent=31 // pred_fallthru
          _
      $region32: #{tpu_custom_call.1} parent=5 // pred_fallthru
        _
      %p1663 = scmp.le.s32.totalorder 2, %s18
      // Predicated region
      $region49: #{tpu_custom_call.1} parent=5 // pred_check
        %p1664 = pneg %p1663
      $region50: #{tpu_custom_call.1} parent=5 // pred_check_branch
        %1666 = sbr.rel (%p1664) target = $region52
      $region51: #{tpu_custom_call.1} parent=5 // pred_region
        %s1667 = ssub.s32 %s18, 2
        // Predicated region
        $region53: #{tpu_custom_call.1} parent=51 // pred_check
          %p1668 = pneg %p140
        $region54: #{tpu_custom_call.1} parent=51 // pred_check_branch
          %1670 = sbr.rel (%p1668) target = $region56
        $region55: #{tpu_custom_call.1} parent=51 // pred_region
          %s1671 = sand.u32 %s125, 1
          %s1672 = scalar_lea.sflag [#allocation6], %s1671
          %s1673 = sand.u32 %s125, 1
          %s1674 = smul.addr %s1673, 80
          %s1675 = scalar_lea.vmem [#allocation10], %s1674
          %1676 = dma.done %s1672, 1280
        $region56: #{tpu_custom_call.1} parent=51 // pred_fallthru
          _
      $region52: #{tpu_custom_call.1} parent=5 // pred_fallthru
        _
    $region6: #{tpu_custom_call.1} parent=1 // loop_footer
      %s22 = sadd.s32 1, %s18
    $region7: #{tpu_custom_call.1} parent=1 // loop_footer_branch
      %17 = sbr.rel target = $region3
    $region8: #{tpu_custom_call.1} parent=1 // loop_exit
      _
    %1677 = vsyncpa [#allocation5], 1
    %s1678 = scalar_lea.sflag [#allocation5], 1
    %1679 = vsyncpa %s1678, 1
    %1680 = vsyncpa [#allocation8], 1
    %s1681 = scalar_lea.sflag [#allocation8], 1
    %1682 = vsyncpa %s1681, 1
    %1683 = vsyncpa [#allocation6], 1
    %s1684 = scalar_lea.sflag [#allocation6], 1
    %1685 = vsyncpa %s1684, 1

</llo_original>
